<compile_context>
chip_gen: v7x
topology: tpu7x:2x2x1
jax: 0.10.0
libtpu: 0.0.40
codegen_flags: <defaults>
</compile_context>

<pallas_src>
import math

import numpy as np

import jax
import jax.numpy as jnp
from jax.experimental import pallas as pl
from jax.experimental.pallas import tpu as pltpu


def _round_up(x, m):
    return ((x + m - 1) // m) * m


# ----------------------------------------------------------------------------
# Pallas kernel: whole network for one batch tile, all activations VMEM-resident
# ----------------------------------------------------------------------------
def _fused_net_kernel(x_ref,
                      a1_ref, b1_ref, a2_ref, b2_ref, a3_ref, b3_ref,
                      a4_ref, b4_ref, a5_ref, b5_ref, a6_ref, b6_ref,
                      o_ref):
    """One grid step == full forward pass for TB images.

    x_ref : (TB, F0) float32    CHW-flattened input images
    aK_ref: (F_{k-1}, F_k) bf16 dense operator of (transposed-)conv layer k
    bK_ref: (1, F_k)  float32   per-position (channel-repeated) bias row
    o_ref : (TB, F6) float32    CHW-flattened output images
    """
    cdt = a1_ref.dtype  # bf16 compute dtype for MXU operands

    def dense(h_bf, a_ref, b_ref):
        # bf16 operands, f32 accumulation on the MXU, f32 bias add on the VPU.
        return jnp.dot(h_bf, a_ref[...],
                       preferred_element_type=jnp.float32) + b_ref[...]

    x_bf = x_ref[...].astype(cdt)                                     # (TB, 768)

    # Encoders (ReLU, then keep a bf16 copy for the next matmul / the skip).
    e1 = jnp.maximum(dense(x_bf, a1_ref, b1_ref), 0.0).astype(cdt)    # (TB, 256)
    e2 = jnp.maximum(dense(e1, a2_ref, b2_ref), 0.0).astype(cdt)      # (TB, 128)
    e3 = jnp.maximum(dense(e2, a3_ref, b3_ref), 0.0).astype(cdt)      # (TB, 128) padded

    # Decoders with skip connections (ReLU first, then add, as in the PyTorch net).
    d1 = (jnp.maximum(dense(e3, a4_ref, b4_ref), 0.0)
          + e2.astype(jnp.float32)).astype(cdt)                       # (TB, 128)
    d2 = (jnp.maximum(dense(d1, a5_ref, b5_ref), 0.0)
          + e1.astype(jnp.float32)).astype(cdt)                       # (TB, 256)

    o_ref[...] = dense(d2, a6_ref, b6_ref)                            # (TB, 768) f32


def fused_net_forward(x_flat, ops, batch_tile=None):
    """x_flat: (B, F0) f32.  ops: {'A1'..'A6': bf16 matrices, 'b1'..'b6': f32 rows}."""
    B, F0 = x_flat.shape
    mats = [ops[f"A{k}"] for k in range(1, 7)]
    rows = [ops[f"b{k}"] for k in range(1, 7)]
    F_out = int(mats[-1].shape[1])

    if batch_tile is None:
        # Sublane-aligned single tile for tiny batches; 512 rows (multiple of
        # 128 and 256 -> full-height MXU tiles on every generation) otherwise.
        batch_tile = min(512, _round_up(B, 8))
    TB = max(8, _round_up(batch_tile, 8))
    B_pad = _round_up(B, TB)
    num_tiles = B_pad // TB
    if B_pad != B:
        x_flat = jnp.pad(x_flat, ((0, B_pad - B), (0, 0)))

    in_specs = [pl.BlockSpec((TB, F0), lambda b: (b, 0))]   # per-tile input block
    operands = [x_flat]
    for A, r in zip(mats, rows):
        # Whole operator / bias resident in VMEM; block index constant across grid
        # so it is fetched once, not per tile.
        in_specs.append(pl.BlockSpec(A.shape, lambda b: (0, 0)))
        in_specs.append(pl.BlockSpec(r.shape, lambda b: (0, 0)))
        operands.extend((A, r))

    flops = 2 * B_pad * sum(int(A.shape[0]) * int(A.shape[1]) for A in mats)
    bytes_accessed = int(
        x_flat.size * x_flat.dtype.itemsize
        + sum(int(A.size) * A.dtype.itemsize for A in mats)
        + sum(int(r.size) * r.dtype.itemsize for r in rows)
        + B_pad * F_out * 4)

    # Only shard the tile axis across TensorCores when there are enough tiles to
    # amortize a per-core copy of the (dominant) weight DMA.
    dim_sem = ("parallel",) if num_tiles >= 4 else ("arbitrary",)

    out = pl.pallas_call(
        _fused_net_kernel,
        out_shape=jax.ShapeDtypeStruct((B_pad, F_out), jnp.float32),
        grid=(num_tiles,),
        in_specs=in_specs,
        out_specs=pl.BlockSpec((TB, F_out), lambda b: (b, 0)),
        compiler_params=pltpu.CompilerParams(dimension_semantics=dim_sem),
        cost_estimate=pl.CostEstimate(
            flops=flops, transcendentals=0, bytes_accessed=bytes_accessed),
    )(*operands)
    return out[:B]


# ----------------------------------------------------------------------------
# Weight preparation (numpy, runs once): conv -> dense CHW->CHW operator
# ----------------------------------------------------------------------------
def _conv2d_matrix(w, in_hw, stride, pad):
    """w: (Cout, Cin, kh, kw).  Returns A of shape (Cin*Hin*Win, Cout*Hout*Wout) s.t.
    for x flattened in (C, H, W) order: conv(x).flatten() == x.flatten() @ A."""
    Cout, Cin, kh, kw = w.shape
    Hin, Win = in_hw
    Hout = (Hin + 2 * pad - kh) // stride + 1
    Wout = (Win + 2 * pad - kw) // stride + 1
    A = np.zeros((Cin, Hin, Win, Cout, Hout, Wout), np.float32)
    for i in range(kh):
        for j in range(kw):
            wt = w[:, :, i, j].T                          # (Cin, Cout)
            for ho in range(Hout):
                hi = ho * stride + i - pad
                if hi < 0 or hi >= Hin:
                    continue
                for wo in range(Wout):
                    wi = wo * stride + j - pad
                    if wi < 0 or wi >= Win:
                        continue
                    A[:, hi, wi, :, ho, wo] += wt
    return A.reshape(Cin * Hin * Win, Cout * Hout * Wout), (Hout, Wout)


def _convT2d_matrix(w, in_hw, stride, pad):
    """w: (Cin, Cout, kh, kw) (PyTorch ConvTranspose2d layout).  Same contract:
    out[co, hi*stride - pad + i, wi*stride - pad + j] += x[ci, hi, wi] * w[ci, co, i, j]."""
    Cin, Cout, kh, kw = w.shape
    Hin, Win = in_hw
    Hout = (Hin - 1) * stride - 2 * pad + kh
    Wout = (Win - 1) * stride - 2 * pad + kw
    A = np.zeros((Cin, Hin, Win, Cout, Hout, Wout), np.float32)
    for i in range(kh):
        for j in range(kw):
            wt = w[:, :, i, j]                            # (Cin, Cout)
            for hi in range(Hin):
                ho = hi * stride - pad + i
                if ho < 0 or ho >= Hout:
                    continue
                for wi in range(Win):
                    wo = wi * stride - pad + j
                    if wo < 0 or wo >= Wout:
                        continue
                    A[:, hi, wi, :, ho, wo] += wt
    return A.reshape(Cin * Hin * Win, Cout * Hout * Wout), (Hout, Wout)


def prepare_operands(params, in_hw=(16, 16), mat_dtype=jnp.bfloat16, lane_pad=128):
    """Lower every layer to a dense operator (bf16) + flattened bias row (f32).
    The 64-wide bottleneck (encoder3 output) is zero-padded to `lane_pad` lanes."""
    p = {k: np.asarray(v, np.float32) for k, v in params.items()}

    mats, rows = [], []

    def add(A, bias, out_hw):
        mats.append(A)
        rows.append(np.repeat(bias, out_hw[0] * out_hw[1]).astype(np.float32))

    hw = in_hw
    A, hw = _conv2d_matrix(p["e1_w"], hw, stride=2, pad=1);   add(A, p["e1_b"], hw)
    A, hw = _conv2d_matrix(p["e2_w"], hw, stride=2, pad=1);   add(A, p["e2_b"], hw)
    A, hw = _conv2d_matrix(p["e3_w"], hw, stride=2, pad=1);   add(A, p["e3_b"], hw)
    A, hw = _convT2d_matrix(p["d1_w"], hw, stride=2, pad=1);  add(A, p["d1_b"], hw)
    A, hw = _convT2d_matrix(p["d2_w"], hw, stride=2, pad=1);  add(A, p["d2_b"], hw)
    A, hw = _convT2d_matrix(p["d3_w"], hw, stride=2, pad=1);  add(A, p["d3_b"], hw)

    # Lane-pad the bottleneck F3 (encoder3 output / decoder1 input) 64 -> 128.
    F3 = mats[2].shape[1]
    F3p = _round_up(F3, lane_pad)
    if F3p != F3:
        mats[2] = np.pad(mats[2], ((0, 0), (0, F3p - F3)))   # extra output columns
        rows[2] = np.pad(rows[2], (0, F3p - F3))             # extra bias lanes (0 -> relu(0)=0)
        mats[3] = np.pad(mats[3], ((0, F3p - F3), (0, 0)))   # extra (zero) input rows

    ops = {}
    for k, (A, r) in enumerate(zip(mats, rows), start=1):
        ops[f"A{k}"] = jnp.asarray(A, dtype=mat_dtype)
        ops[f"b{k}"] = jnp.asarray(r[None, :], dtype=jnp.float32)
    return ops


# ----------------------------------------------------------------------------
# Parameter init (deterministic, PyTorch-like uniform(+-1/sqrt(fan_in)))
# ----------------------------------------------------------------------------
def init_params(key):
    def u(k, shape, fan_in):
        bound = 1.0 / math.sqrt(fan_in)
        return jax.random.uniform(k, shape, jnp.float32, -bound, bound)

    ks = jax.random.split(key, 12)
    p = {}
    # encoders: Conv2d weight (Cout, Cin, 3, 3)
    p["e1_w"] = u(ks[0], (4, 3, 3, 3), 3 * 9);    p["e1_b"] = u(ks[1], (4,), 3 * 9)
    p["e2_w"] = u(ks[2], (8, 4, 3, 3), 4 * 9);    p["e2_b"] = u(ks[3], (8,), 4 * 9)
    p["e3_w"] = u(ks[4], (16, 8, 3, 3), 8 * 9);   p["e3_b"] = u(ks[5], (16,), 8 * 9)
    # decoders: ConvTranspose2d weight (Cin, Cout, 4, 4)
    p["d1_w"] = u(ks[6], (16, 8, 4, 4), 8 * 16);  p["d1_b"] = u(ks[7], (8,), 8 * 16)
    p["d2_w"] = u(ks[8], (8, 4, 4, 4), 4 * 16);   p["d2_b"] = u(ks[9], (4,), 4 * 16)
    p["d3_w"] = u(ks[10], (4, 3, 4, 4), 3 * 16);  p["d3_b"] = u(ks[11], (3,), 3 * 16)
    return p


# ----------------------------------------------------------------------------
# Forward pass (mirrors Net.forward): reshape -> one pallas_call -> reshape
# ----------------------------------------------------------------------------
@jax.jit
def net_forward(x_nchw, ops):
    B, C, H, W = x_nchw.shape
    x_flat = x_nchw.reshape(B, C * H * W)                 # CHW flatten (no transpose)
    out_flat = fused_net_forward(x_flat, ops)
    c_out = out_flat.shape[-1] // (H * W)
    return out_flat.reshape(B, c_out, H, W)


# ----------------------------------------------------------------------------
# Pure-JAX reference (lax.conv) of the original PyTorch module, for validation
# ----------------------------------------------------------------------------
def _ref_conv(x, w, b, stride, pad):
    out = jax.lax.conv_general_dilated(
        x, w, window_strides=(stride, stride),
        padding=((pad, pad), (pad, pad)),
        dimension_numbers=("NCHW", "OIHW", "NCHW"))
    return out + b[None, :, None, None]


def _ref_conv_transpose(x, w, b, stride, pad):
    kh = w.shape[2]
    w_eq = jnp.transpose(w, (1, 0, 2, 3))[:, :, ::-1, ::-1]
    out = jax.lax.conv_general_dilated(
        x, w_eq, window_strides=(1, 1),
        padding=((kh - 1 - pad, kh - 1 - pad), (kh - 1 - pad, kh - 1 - pad)),
        lhs_dilation=(stride, stride),
        dimension_numbers=("NCHW", "OIHW", "NCHW"))
    return out + b[None, :, None, None]


def net_forward_reference(x, p):
    e1 = jax.nn.relu(_ref_conv(x, p["e1_w"], p["e1_b"], 2, 1))
    e2 = jax.nn.relu(_ref_conv(e1, p["e2_w"], p["e2_b"], 2, 1))
    e3 = jax.nn.relu(_ref_conv(e2, p["e3_w"], p["e3_b"], 2, 1))
    d1 = jax.nn.relu(_ref_conv_transpose(e3, p["d1_w"], p["d1_b"], 2, 1)) + e2
    d2 = jax.nn.relu(_ref_conv_transpose(d1, p["d2_w"], p["d2_b"], 2, 1)) + e1
    return _ref_conv_transpose(d2, p["d3_w"], p["d3_b"], 2, 1)


# ----------------------------------------------------------------------------
if __name__ == "__main__":
    key = jax.random.PRNGKey(0)
    k_param, k_input = jax.random.split(key)

    params = init_params(k_param)
    ops = prepare_operands(params, in_hw=(16, 16), mat_dtype=jnp.bfloat16)

    x = jax.random.normal(k_input, (2, 3, 16, 16), jnp.float32)   # NCHW, like PyTorch

    out = jax.block_until_ready(net_forward(x, ops))
    assert out.shape == (2, 3, 16, 16), out.shape
    assert out.dtype == jnp.float32

    # Validate against a plain-JAX reference of the PyTorch module (bf16 operands
    # and bf16 inter-layer activations in the kernel -> loose tolerance).
    ref = jax.block_until_ready(net_forward_reference(x, params))
    np.testing.assert_allclose(np.asarray(out), np.asarray(ref), rtol=0.1, atol=0.05)

    print("KERNEL_OK")
</pallas_src>

<mosaic_0001>
module attributes {stable_mosaic.version = 11 : i64} {
  func.func @_fused_net_kernel(%arg0: i32, %arg1: memref<8x768xf32, #tpu.memory_space<vmem>>, %arg2: memref<768x256xbf16, #tpu.memory_space<vmem>>, %arg3: memref<1x256xf32, #tpu.memory_space<vmem>>, %arg4: memref<256x128xbf16, #tpu.memory_space<vmem>>, %arg5: memref<1x128xf32, #tpu.memory_space<vmem>>, %arg6: memref<128x128xbf16, #tpu.memory_space<vmem>>, %arg7: memref<1x128xf32, #tpu.memory_space<vmem>>, %arg8: memref<128x128xbf16, #tpu.memory_space<vmem>>, %arg9: memref<1x128xf32, #tpu.memory_space<vmem>>, %arg10: memref<128x256xbf16, #tpu.memory_space<vmem>>, %arg11: memref<1x256xf32, #tpu.memory_space<vmem>>, %arg12: memref<256x768xbf16, #tpu.memory_space<vmem>>, %arg13: memref<1x768xf32, #tpu.memory_space<vmem>>, %arg14: memref<8x768xf32, #tpu.memory_space<vmem>>) attributes {dimension_semantics = [#tpu.dimension_semantics<arbitrary>], iteration_bounds = array<i64: 1>, scalar_prefetch = 0 : i64, scratch_operands = 0 : i64, tpu.core_type = #tpu.core_type<tc>, window_params = [{transform_indices = @transform_0, window_bounds = array<i64: 8, 768>}, {pipeline_mode = #tpu.pipeline_mode<synchronous>, transform_indices = @transform_1, window_bounds = array<i64: 768, 256>}, {pipeline_mode = #tpu.pipeline_mode<synchronous>, transform_indices = @transform_2, window_bounds = array<i64: 1, 256>}, {pipeline_mode = #tpu.pipeline_mode<synchronous>, transform_indices = @transform_3, window_bounds = array<i64: 256, 128>}, {pipeline_mode = #tpu.pipeline_mode<synchronous>, transform_indices = @transform_4, window_bounds = array<i64: 1, 128>}, {pipeline_mode = #tpu.pipeline_mode<synchronous>, transform_indices = @transform_5, window_bounds = array<i64: 128, 128>}, {pipeline_mode = #tpu.pipeline_mode<synchronous>, transform_indices = @transform_6, window_bounds = array<i64: 1, 128>}, {pipeline_mode = #tpu.pipeline_mode<synchronous>, transform_indices = @transform_7, window_bounds = array<i64: 128, 128>}, {pipeline_mode = #tpu.pipeline_mode<synchronous>, transform_indices = @transform_8, window_bounds = array<i64: 1, 128>}, {pipeline_mode = #tpu.pipeline_mode<synchronous>, transform_indices = @transform_9, window_bounds = array<i64: 128, 256>}, {pipeline_mode = #tpu.pipeline_mode<synchronous>, transform_indices = @transform_10, window_bounds = array<i64: 1, 256>}, {pipeline_mode = #tpu.pipeline_mode<synchronous>, transform_indices = @transform_11, window_bounds = array<i64: 256, 768>}, {pipeline_mode = #tpu.pipeline_mode<synchronous>, transform_indices = @transform_12, window_bounds = array<i64: 1, 768>}, {transform_indices = @transform_13, window_bounds = array<i64: 8, 768>}]} {
    %c0 = arith.constant 0 : index
    %c0_0 = arith.constant 0 : index
    %0 = vector.load %arg1[%c0, %c0_0] : memref<8x768xf32, #tpu.memory_space<vmem>>, vector<8x768xf32>
    %1 = arith.truncf %0 : vector<8x768xf32> to vector<8x768xbf16>
    %c0_1 = arith.constant 0 : index
    %c0_2 = arith.constant 0 : index
    %2 = vector.load %arg2[%c0_1, %c0_2] : memref<768x256xbf16, #tpu.memory_space<vmem>>, vector<768x256xbf16>
    %cst = arith.constant dense<0.000000e+00> : vector<8x256xf32>
    %3 = tpu.matmul %1, %2, %cst {dimension_numbers = #tpu.dot_dimension_numbers<[1], [0], [0], [1], [0, 0, 1, 1], [], []>} : vector<8x768xbf16>, vector<768x256xbf16>, vector<8x256xf32> -> vector<8x256xf32>
    %c0_3 = arith.constant 0 : index
    %c0_4 = arith.constant 0 : index
    %4 = vector.load %arg3[%c0_3, %c0_4] : memref<1x256xf32, #tpu.memory_space<vmem>>, vector<1x256xf32>
    %5 = vector.broadcast %4 : vector<1x256xf32> to vector<8x256xf32>
    %6 = arith.addf %3, %5 : vector<8x256xf32>
    %cst_5 = arith.constant 0.000000e+00 : f32
    %7 = vector.broadcast %cst_5 : f32 to vector<8x256xf32>
    %8 = arith.maximumf %6, %7 : vector<8x256xf32>
    %9 = arith.truncf %8 : vector<8x256xf32> to vector<8x256xbf16>
    %c0_6 = arith.constant 0 : index
    %c0_7 = arith.constant 0 : index
    %10 = vector.load %arg4[%c0_6, %c0_7] : memref<256x128xbf16, #tpu.memory_space<vmem>>, vector<256x128xbf16>
    %cst_8 = arith.constant dense<0.000000e+00> : vector<8x128xf32>
    %11 = tpu.matmul %9, %10, %cst_8 {dimension_numbers = #tpu.dot_dimension_numbers<[1], [0], [0], [1], [0, 0, 1, 1], [], []>} : vector<8x256xbf16>, vector<256x128xbf16>, vector<8x128xf32> -> vector<8x128xf32>
    %c0_9 = arith.constant 0 : index
    %c0_10 = arith.constant 0 : index
    %12 = vector.load %arg5[%c0_9, %c0_10] : memref<1x128xf32, #tpu.memory_space<vmem>>, vector<1x128xf32>
    %13 = vector.broadcast %12 : vector<1x128xf32> to vector<8x128xf32>
    %14 = arith.addf %11, %13 : vector<8x128xf32>
    %cst_11 = arith.constant 0.000000e+00 : f32
    %15 = vector.broadcast %cst_11 : f32 to vector<8x128xf32>
    %16 = arith.maximumf %14, %15 : vector<8x128xf32>
    %17 = arith.truncf %16 : vector<8x128xf32> to vector<8x128xbf16>
    %c0_12 = arith.constant 0 : index
    %c0_13 = arith.constant 0 : index
    %18 = vector.load %arg6[%c0_12, %c0_13] : memref<128x128xbf16, #tpu.memory_space<vmem>>, vector<128x128xbf16>
    %cst_14 = arith.constant dense<0.000000e+00> : vector<8x128xf32>
    %19 = tpu.matmul %17, %18, %cst_14 {dimension_numbers = #tpu.dot_dimension_numbers<[1], [0], [0], [1], [0, 0, 1, 1], [], []>} : vector<8x128xbf16>, vector<128x128xbf16>, vector<8x128xf32> -> vector<8x128xf32>
    %c0_15 = arith.constant 0 : index
    %c0_16 = arith.constant 0 : index
    %20 = vector.load %arg7[%c0_15, %c0_16] : memref<1x128xf32, #tpu.memory_space<vmem>>, vector<1x128xf32>
    %21 = vector.broadcast %20 : vector<1x128xf32> to vector<8x128xf32>
    %22 = arith.addf %19, %21 : vector<8x128xf32>
    %cst_17 = arith.constant 0.000000e+00 : f32
    %23 = vector.broadcast %cst_17 : f32 to vector<8x128xf32>
    %24 = arith.maximumf %22, %23 : vector<8x128xf32>
    %25 = arith.truncf %24 : vector<8x128xf32> to vector<8x128xbf16>
    %c0_18 = arith.constant 0 : index
    %c0_19 = arith.constant 0 : index
    %26 = vector.load %arg8[%c0_18, %c0_19] : memref<128x128xbf16, #tpu.memory_space<vmem>>, vector<128x128xbf16>
    %cst_20 = arith.constant dense<0.000000e+00> : vector<8x128xf32>
    %27 = tpu.matmul %25, %26, %cst_20 {dimension_numbers = #tpu.dot_dimension_numbers<[1], [0], [0], [1], [0, 0, 1, 1], [], []>} : vector<8x128xbf16>, vector<128x128xbf16>, vector<8x128xf32> -> vector<8x128xf32>
    %c0_21 = arith.constant 0 : index
    %c0_22 = arith.constant 0 : index
    %28 = vector.load %arg9[%c0_21, %c0_22] : memref<1x128xf32, #tpu.memory_space<vmem>>, vector<1x128xf32>
    %29 = vector.broadcast %28 : vector<1x128xf32> to vector<8x128xf32>
    %30 = arith.addf %27, %29 : vector<8x128xf32>
    %cst_23 = arith.constant 0.000000e+00 : f32
    %31 = vector.broadcast %cst_23 : f32 to vector<8x128xf32>
    %32 = arith.maximumf %30, %31 : vector<8x128xf32>
    %33 = arith.extf %17 : vector<8x128xbf16> to vector<8x128xf32>
    %34 = arith.addf %32, %33 : vector<8x128xf32>
    %35 = arith.truncf %34 : vector<8x128xf32> to vector<8x128xbf16>
    %c0_24 = arith.constant 0 : index
    %c0_25 = arith.constant 0 : index
    %36 = vector.load %arg10[%c0_24, %c0_25] : memref<128x256xbf16, #tpu.memory_space<vmem>>, vector<128x256xbf16>
    %cst_26 = arith.constant dense<0.000000e+00> : vector<8x256xf32>
    %37 = tpu.matmul %35, %36, %cst_26 {dimension_numbers = #tpu.dot_dimension_numbers<[1], [0], [0], [1], [0, 0, 1, 1], [], []>} : vector<8x128xbf16>, vector<128x256xbf16>, vector<8x256xf32> -> vector<8x256xf32>
    %c0_27 = arith.constant 0 : index
    %c0_28 = arith.constant 0 : index
    %38 = vector.load %arg11[%c0_27, %c0_28] : memref<1x256xf32, #tpu.memory_space<vmem>>, vector<1x256xf32>
    %39 = vector.broadcast %38 : vector<1x256xf32> to vector<8x256xf32>
    %40 = arith.addf %37, %39 : vector<8x256xf32>
    %cst_29 = arith.constant 0.000000e+00 : f32
    %41 = vector.broadcast %cst_29 : f32 to vector<8x256xf32>
    %42 = arith.maximumf %40, %41 : vector<8x256xf32>
    %43 = arith.extf %9 : vector<8x256xbf16> to vector<8x256xf32>
    %44 = arith.addf %42, %43 : vector<8x256xf32>
    %45 = arith.truncf %44 : vector<8x256xf32> to vector<8x256xbf16>
    %c0_30 = arith.constant 0 : index
    %c0_31 = arith.constant 0 : index
    %46 = vector.load %arg12[%c0_30, %c0_31] : memref<256x768xbf16, #tpu.memory_space<vmem>>, vector<256x768xbf16>
    %cst_32 = arith.constant dense<0.000000e+00> : vector<8x768xf32>
    %47 = tpu.matmul %45, %46, %cst_32 {dimension_numbers = #tpu.dot_dimension_numbers<[1], [0], [0], [1], [0, 0, 1, 1], [], []>} : vector<8x256xbf16>, vector<256x768xbf16>, vector<8x768xf32> -> vector<8x768xf32>
    %c0_33 = arith.constant 0 : index
    %c0_34 = arith.constant 0 : index
    %48 = vector.load %arg13[%c0_33, %c0_34] : memref<1x768xf32, #tpu.memory_space<vmem>>, vector<1x768xf32>
    %49 = vector.broadcast %48 : vector<1x768xf32> to vector<8x768xf32>
    %50 = arith.addf %47, %49 : vector<8x768xf32>
    %c0_35 = arith.constant 0 : index
    %c0_36 = arith.constant 0 : index
    %51 = vector.load %arg14[%c0_35, %c0_36] : memref<8x768xf32, #tpu.memory_space<vmem>>, vector<8x768xf32>
    tpu.vector_store %arg14[%c0_35, %c0_36], %50 {strides = array<i32>} : memref<8x768xf32, #tpu.memory_space<vmem>>, vector<8x768xf32>,
    return
  }
  func.func @transform_0(%arg0: i32) -> (i32, i32) {
    %c0_i32 = arith.constant 0 : i32
    %c0_i32_0 = arith.constant 0 : i32
    return %arg0, %c0_i32 : i32, i32
  }
  func.func @transform_1(%arg0: i32) -> (i32, i32) {
    %c0_i32 = arith.constant 0 : i32
    %c0_i32_0 = arith.constant 0 : i32
    %c0_i32_1 = arith.constant 0 : i32
    return %c0_i32, %c0_i32_0 : i32, i32
  }
  func.func @transform_2(%arg0: i32) -> (i32, i32) {
    %c0_i32 = arith.constant 0 : i32
    %c0_i32_0 = arith.constant 0 : i32
    %c0_i32_1 = arith.constant 0 : i32
    return %c0_i32, %c0_i32_0 : i32, i32
  }
  func.func @transform_3(%arg0: i32) -> (i32, i32) {
    %c0_i32 = arith.constant 0 : i32
    %c0_i32_0 = arith.constant 0 : i32
    %c0_i32_1 = arith.constant 0 : i32
    return %c0_i32, %c0_i32_0 : i32, i32
  }
  func.func @transform_4(%arg0: i32) -> (i32, i32) {
    %c0_i32 = arith.constant 0 : i32
    %c0_i32_0 = arith.constant 0 : i32
    %c0_i32_1 = arith.constant 0 : i32
    return %c0_i32, %c0_i32_0 : i32, i32
  }
  func.func @transform_5(%arg0: i32) -> (i32, i32) {
    %c0_i32 = arith.constant 0 : i32
    %c0_i32_0 = arith.constant 0 : i32
    %c0_i32_1 = arith.constant 0 : i32
    return %c0_i32, %c0_i32_0 : i32, i32
  }
  func.func @transform_6(%arg0: i32) -> (i32, i32) {
    %c0_i32 = arith.constant 0 : i32
    %c0_i32_0 = arith.constant 0 : i32
    %c0_i32_1 = arith.constant 0 : i32
    return %c0_i32, %c0_i32_0 : i32, i32
  }
  func.func @transform_7(%arg0: i32) -> (i32, i32) {
    %c0_i32 = arith.constant 0 : i32
    %c0_i32_0 = arith.constant 0 : i32
    %c0_i32_1 = arith.constant 0 : i32
    return %c0_i32, %c0_i32_0 : i32, i32
  }
  func.func @transform_8(%arg0: i32) -> (i32, i32) {
    %c0_i32 = arith.constant 0 : i32
    %c0_i32_0 = arith.constant 0 : i32
    %c0_i32_1 = arith.constant 0 : i32
    return %c0_i32, %c0_i32_0 : i32, i32
  }
  func.func @transform_9(%arg0: i32) -> (i32, i32) {
    %c0_i32 = arith.constant 0 : i32
    %c0_i32_0 = arith.constant 0 : i32
    %c0_i32_1 = arith.constant 0 : i32
    return %c0_i32, %c0_i32_0 : i32, i32
  }
  func.func @transform_10(%arg0: i32) -> (i32, i32) {
    %c0_i32 = arith.constant 0 : i32
    %c0_i32_0 = arith.constant 0 : i32
    %c0_i32_1 = arith.constant 0 : i32
    return %c0_i32, %c0_i32_0 : i32, i32
  }
  func.func @transform_11(%arg0: i32) -> (i32, i32) {
    %c0_i32 = arith.constant 0 : i32
    %c0_i32_0 = arith.constant 0 : i32
    %c0_i32_1 = arith.constant 0 : i32
    return %c0_i32, %c0_i32_0 : i32, i32
  }
  func.func @transform_12(%arg0: i32) -> (i32, i32) {
    %c0_i32 = arith.constant 0 : i32
    %c0_i32_0 = arith.constant 0 : i32
    %c0_i32_1 = arith.constant 0 : i32
    return %c0_i32, %c0_i32_0 : i32, i32
  }
  func.func @transform_13(%arg0: i32) -> (i32, i32) {
    %c0_i32 = arith.constant 0 : i32
    %c0_i32_0 = arith.constant 0 : i32
    return %arg0, %c0_i32 : i32, i32
  }
}

</mosaic_0001>

<llo_original>
// kernel: net_forward.1
$region0: #{net_forward.1}
  #allocation0 [shape = 'u32[]', space=smem, size = 0x4, offset = 0x4, fixed_abs, tag = 'smem constant byte address 0x4 - core index']
  #allocation1 [shape = 'u32[144,128]{1,0:T(1,128)}', space=vmem, size = 0x12000, scoped, tag = 'internal scratch']
  %s0 = inlined_call_operand.vmem [shape: f32[8,768], index: 0, kind: input, shape index: {}]
  %s1 = inlined_call_operand.hbm [shape: bf16[768,256], index: 1, kind: input, shape index: {}]
  %s2 = inlined_call_operand.vmem [shape: f32[1,256], index: 2, kind: input, shape index: {}]
  %s3 = inlined_call_operand.vmem [shape: bf16[256,128], index: 3, kind: input, shape index: {}]
  %s4 = inlined_call_operand.vmem [shape: f32[1,128], index: 4, kind: input, shape index: {}]
  %s5 = inlined_call_operand.hbm [shape: bf16[128,128], index: 5, kind: input, shape index: {}]
  %s6 = inlined_call_operand.vmem [shape: f32[1,128], index: 6, kind: input, shape index: {}]
  %s7 = inlined_call_operand.hbm [shape: bf16[128,128], index: 7, kind: input, shape index: {}]
  %s8 = inlined_call_operand.vmem [shape: f32[1,128], index: 8, kind: input, shape index: {}]
  %s9 = inlined_call_operand.hbm [shape: bf16[128,256], index: 9, kind: input, shape index: {}]
  %s10 = inlined_call_operand.vmem [shape: f32[1,256], index: 10, kind: input, shape index: {}]
  %s11 = inlined_call_operand.hbm [shape: bf16[256,768], index: 11, kind: input, shape index: {}]
  %s12 = inlined_call_operand.vmem [shape: f32[1,768], index: 12, kind: input, shape index: {}]
  %s13 = inlined_call_operand.vmem [shape: f32[8,768], index: 13, kind: output, shape index: {}]
  %s14 = sld [smem:[#allocation0]]
  $region82: #{net_forward.1} parent=0
    _
  %s16 = ssub.s32 1, %s14
  %s17 = scalar_select 0, %s16, %s14
  $region1: #{net_forward.1} parent=0
    #allocation2 [shape = 'u8[393216]{0}', space=vmem, size = 0x60000, scoped, tag = 'input window, operand 1, single buffered']
    #allocation3 [shape = 's32[1]{0}', space=sflag, size = 0x4, scoped, tag = 'scoped memory for net_forward.1']
    #allocation4 [shape = 'u8[32768]{0}', space=vmem, size = 0x8000, scoped, tag = 'input window, operand 5, single buffered']
    #allocation5 [shape = 's32[1]{0}', space=sflag, size = 0x4, scoped, tag = 'scoped memory for net_forward.1']
    #allocation6 [shape = 'u8[32768]{0}', space=vmem, size = 0x8000, scoped, tag = 'input window, operand 7, single buffered']
    #allocation7 [shape = 'u8[65536]{0}', space=vmem, size = 0x10000, scoped, tag = 'input window, operand 9, single buffered']
    #allocation8 [shape = 's32[1]{0}', space=sflag, size = 0x4, scoped, tag = 'scoped memory for net_forward.1']
    #allocation9 [shape = 'u8[393216]{0}', space=vmem, size = 0x60000, scoped, tag = 'input window, operand 11, single buffered']
    %18 = vsyncpa [#allocation3], 0
    %19 = vsyncpa [#allocation5], 0
    %20 = vsyncpa [#allocation8], 0
    // Predicated region
    $region2: #{net_forward.1} parent=1 // pred_check
      _
    $region3: #{net_forward.1} parent=1 // pred_check_branch
      %22 = sbr.rel (0) target = $region5
    $region4: #{net_forward.1} parent=1 // pred_region
      _
    $region5: #{net_forward.1} parent=1 // pred_fallthru
      _
    // Predicated region
    $region6: #{net_forward.1} parent=1 // pred_check
      _
    $region7: #{net_forward.1} parent=1 // pred_check_branch
      %24 = sbr.rel (0) target = $region9
    $region8: #{net_forward.1} parent=1 // pred_region
      %s26 = ssub.s32 12288, 12288
      %27 = vsyncadd [#allocation3], %s26
      %s28 = sshll.u32 [#allocation2], 4
      %s29 = int_to_ptr.vmem [resolvable:$true] %s28
      %34 = dma.hbm_to_vmem [thread:$0]  %s1, 12288, %s29, [#allocation3], 128, 128, 8
    $region9: #{net_forward.1} parent=1 // pred_fallthru
      _
    // Predicated region
    $region10: #{net_forward.1} parent=1 // pred_check
      _
    $region11: #{net_forward.1} parent=1 // pred_check_branch
      %36 = sbr.rel (0) target = $region13
    $region12: #{net_forward.1} parent=1 // pred_region
      _
    $region13: #{net_forward.1} parent=1 // pred_fallthru
      _
    // Predicated region
    $region14: #{net_forward.1} parent=1 // pred_check
      _
    $region15: #{net_forward.1} parent=1 // pred_check_branch
      %38 = sbr.rel (0) target = $region17
    $region16: #{net_forward.1} parent=1 // pred_region
      _
    $region17: #{net_forward.1} parent=1 // pred_fallthru
      _
    // Predicated region
    $region18: #{net_forward.1} parent=1 // pred_check
      _
    $region19: #{net_forward.1} parent=1 // pred_check_branch
      %40 = sbr.rel (0) target = $region21
    $region20: #{net_forward.1} parent=1 // pred_region
      _
    $region21: #{net_forward.1} parent=1 // pred_fallthru
      _
    // Predicated region
    $region22: #{net_forward.1} parent=1 // pred_check
      _
    $region23: #{net_forward.1} parent=1 // pred_check_branch
      %42 = sbr.rel (0) target = $region25
    $region24: #{net_forward.1} parent=1 // pred_region
      %s44 = ssub.s32 1024, 1024
      %45 = vsyncadd [#allocation5], %s44
      %s46 = sshll.u32 [#allocation4], 4
      %s47 = int_to_ptr.vmem [resolvable:$true] %s46
      %52 = dma.hbm_to_vmem [thread:$0]  %s5, 1024, %s47, [#allocation5], 64, 64, 4
    $region25: #{net_forward.1} parent=1 // pred_fallthru
      _
    // Predicated region
    $region26: #{net_forward.1} parent=1 // pred_check
      _
    $region27: #{net_forward.1} parent=1 // pred_check_branch
      %54 = sbr.rel (0) target = $region29
    $region28: #{net_forward.1} parent=1 // pred_region
      _
    $region29: #{net_forward.1} parent=1 // pred_fallthru
      _
    // Predicated region
    $region30: #{net_forward.1} parent=1 // pred_check
      _
    $region31: #{net_forward.1} parent=1 // pred_check_branch
      %56 = sbr.rel (0) target = $region33
    $region32: #{net_forward.1} parent=1 // pred_region
      %s58 = ssub.s32 1024, 1024
      %59 = vsyncadd [#allocation5], %s58
      %s60 = sshll.u32 [#allocation6], 4
      %s61 = int_to_ptr.vmem [resolvable:$true] %s60
      %66 = dma.hbm_to_vmem [thread:$0]  %s7, 1024, %s61, [#allocation5], 64, 64, 4
    $region33: #{net_forward.1} parent=1 // pred_fallthru
      _
    // Predicated region
    $region34: #{net_forward.1} parent=1 // pred_check
      _
    $region35: #{net_forward.1} parent=1 // pred_check_branch
      %68 = sbr.rel (0) target = $region37
    $region36: #{net_forward.1} parent=1 // pred_region
      _
    $region37: #{net_forward.1} parent=1 // pred_fallthru
      _
    // Predicated region
    $region38: #{net_forward.1} parent=1 // pred_check
      _
    $region39: #{net_forward.1} parent=1 // pred_check_branch
      %70 = sbr.rel (0) target = $region41
    $region40: #{net_forward.1} parent=1 // pred_region
      %s72 = ssub.s32 2048, 2048
      %73 = vsyncadd [#allocation8], %s72
      %s74 = sshll.u32 [#allocation7], 4
      %s75 = int_to_ptr.vmem [resolvable:$true] %s74
      %80 = dma.hbm_to_vmem [thread:$0]  %s9, 2048, %s75, [#allocation8], 128, 128, 8
    $region41: #{net_forward.1} parent=1 // pred_fallthru
      _
    // Predicated region
    $region42: #{net_forward.1} parent=1 // pred_check
      _
    $region43: #{net_forward.1} parent=1 // pred_check_branch
      %82 = sbr.rel (0) target = $region45
    $region44: #{net_forward.1} parent=1 // pred_region
      _
    $region45: #{net_forward.1} parent=1 // pred_fallthru
      _
    // Predicated region
    $region46: #{net_forward.1} parent=1 // pred_check
      _
    $region47: #{net_forward.1} parent=1 // pred_check_branch
      %84 = sbr.rel (0) target = $region49
    $region48: #{net_forward.1} parent=1 // pred_region
      %s86 = ssub.s32 12288, 12288
      %87 = vsyncadd [#allocation8], %s86
      %s88 = sshll.u32 [#allocation9], 4
      %s89 = int_to_ptr.vmem [resolvable:$true] %s88
      %94 = dma.hbm_to_vmem [thread:$0]  %s11, 12288, %s89, [#allocation8], 384, 384, 24
    $region49: #{net_forward.1} parent=1 // pred_fallthru
      _
    // Predicated region
    $region50: #{net_forward.1} parent=1 // pred_check
      _
    $region51: #{net_forward.1} parent=1 // pred_check_branch
      %96 = sbr.rel (0) target = $region53
    $region52: #{net_forward.1} parent=1 // pred_region
      _
    $region53: #{net_forward.1} parent=1 // pred_fallthru
      _
    // Predicated region
    $region54: #{net_forward.1} parent=1 // pred_check
      _
    $region55: #{net_forward.1} parent=1 // pred_check_branch
      %98 = sbr.rel (0) target = $region57
    $region56: #{net_forward.1} parent=1 // pred_region
      %99 = dma.done [#allocation3], 12288
    $region57: #{net_forward.1} parent=1 // pred_fallthru
      _
    // Predicated region
    $region58: #{net_forward.1} parent=1 // pred_check
      _
    $region59: #{net_forward.1} parent=1 // pred_check_branch
      %101 = sbr.rel (0) target = $region61
    $region60: #{net_forward.1} parent=1 // pred_region
      %102 = dma.done [#allocation5], 1024
    $region61: #{net_forward.1} parent=1 // pred_fallthru
      _
    // Predicated region
    $region62: #{net_forward.1} parent=1 // pred_check
      _
    $region63: #{net_forward.1} parent=1 // pred_check_branch
      %104 = sbr.rel (0) target = $region65
    $region64: #{net_forward.1} parent=1 // pred_region
      %105 = dma.done [#allocation5], 1024
    $region65: #{net_forward.1} parent=1 // pred_fallthru
      _
    // Predicated region
    $region66: #{net_forward.1} parent=1 // pred_check
      _
    $region67: #{net_forward.1} parent=1 // pred_check_branch
      %107 = sbr.rel (0) target = $region69
    $region68: #{net_forward.1} parent=1 // pred_region
      %108 = dma.done [#allocation8], 2048
    $region69: #{net_forward.1} parent=1 // pred_fallthru
      _
    // Predicated region
    $region70: #{net_forward.1} parent=1 // pred_check
      _
    $region71: #{net_forward.1} parent=1 // pred_check_branch
      %110 = sbr.rel (0) target = $region73
    $region72: #{net_forward.1} parent=1 // pred_region
      %111 = dma.done [#allocation8], 12288
    $region73: #{net_forward.1} parent=1 // pred_fallthru
      _
    %v113 = vld [vmem:[%s0] sm:$0xff]
    %v114 = vld [vmem:[%s0 + $0x8] sm:$0xff]
    %v115 = vld [vmem:[%s0 + $0x10] sm:$0xff]
    %v116 = vld [vmem:[%s0 + $0x18] sm:$0xff]
    %v117 = vld [vmem:[%s0 + $0x20] sm:$0xff]
    %v118 = vld [vmem:[%s0 + $0x28] sm:$0xff]
    %v119 = vpack.c.bf16 %v113, %v113
    %v120 = vpack.c.bf16 %v114, %v114
    %v121 = vpack.c.bf16 %v115, %v115
    %v122 = vpack.c.bf16 %v116, %v116
    %v123 = vpack.c.bf16 %v117, %v117
    %v124 = vpack.c.bf16 %v118, %v118
    %v125 = vld [vmem:[#allocation2] sm:$0xff]
    %v126 = vld [vmem:[#allocation2 + $0x8] sm:$0xff]
    %v127 = vld [vmem:[#allocation2 + $0x10] sm:$0xff]
    %v128 = vld [vmem:[#allocation2 + $0x18] sm:$0xff]
    %v129 = vld [vmem:[#allocation2 + $0x20] sm:$0xff]
    %v130 = vld [vmem:[#allocation2 + $0x28] sm:$0xff]
    %v131 = vld [vmem:[#allocation2 + $0x30] sm:$0xff]
    %v132 = vld [vmem:[#allocation2 + $0x38] sm:$0xff]
    %v133 = vld [vmem:[#allocation2 + $0x40] sm:$0xff]
    %v134 = vld [vmem:[#allocation2 + $0x48] sm:$0xff]
    %v135 = vld [vmem:[#allocation2 + $0x50] sm:$0xff]
    %v136 = vld [vmem:[#allocation2 + $0x58] sm:$0xff]
    %v137 = vld [vmem:[#allocation2 + $0x60] sm:$0xff]
    %v138 = vld [vmem:[#allocation2 + $0x68] sm:$0xff]
    %v139 = vld [vmem:[#allocation2 + $0x70] sm:$0xff]
    %v140 = vld [vmem:[#allocation2 + $0x78] sm:$0xff]
    %v141 = vld [vmem:[#allocation2 + $0x80] sm:$0xff]
    %v142 = vld [vmem:[#allocation2 + $0x88] sm:$0xff]
    %v143 = vld [vmem:[#allocation2 + $0x90] sm:$0xff]
    %v144 = vld [vmem:[#allocation2 + $0x98] sm:$0xff]
    %v145 = vld [vmem:[#allocation2 + $0xa0] sm:$0xff]
    %v146 = vld [vmem:[#allocation2 + $0xa8] sm:$0xff]
    %v147 = vld [vmem:[#allocation2 + $0xb0] sm:$0xff]
    %v148 = vld [vmem:[#allocation2 + $0xb8] sm:$0xff]
    %v149 = vld [vmem:[#allocation2 + $0xc0] sm:$0xff]
    %v150 = vld [vmem:[#allocation2 + $0xc8] sm:$0xff]
    %v151 = vld [vmem:[#allocation2 + $0xd0] sm:$0xff]
    %v152 = vld [vmem:[#allocation2 + $0xd8] sm:$0xff]
    %v153 = vld [vmem:[#allocation2 + $0xe0] sm:$0xff]
    %v154 = vld [vmem:[#allocation2 + $0xe8] sm:$0xff]
    %v155 = vld [vmem:[#allocation2 + $0xf0] sm:$0xff]
    %v156 = vld [vmem:[#allocation2 + $0xf8] sm:$0xff]
    %v157 = vld [vmem:[#allocation2 + $0x100] sm:$0xff]
    %v158 = vld [vmem:[#allocation2 + $0x108] sm:$0xff]
    %v159 = vld [vmem:[#allocation2 + $0x110] sm:$0xff]
    %v160 = vld [vmem:[#allocation2 + $0x118] sm:$0xff]
    %v161 = vld [vmem:[#allocation2 + $0x120] sm:$0xff]
    %v162 = vld [vmem:[#allocation2 + $0x128] sm:$0xff]
    %v163 = vld [vmem:[#allocation2 + $0x130] sm:$0xff]
    %v164 = vld [vmem:[#allocation2 + $0x138] sm:$0xff]
    %v165 = vld [vmem:[#allocation2 + $0x140] sm:$0xff]
    %v166 = vld [vmem:[#allocation2 + $0x148] sm:$0xff]
    %v167 = vld [vmem:[#allocation2 + $0x150] sm:$0xff]
    %v168 = vld [vmem:[#allocation2 + $0x158] sm:$0xff]
    %v169 = vld [vmem:[#allocation2 + $0x160] sm:$0xff]
    %v170 = vld [vmem:[#allocation2 + $0x168] sm:$0xff]
    %v171 = vld [vmem:[#allocation2 + $0x170] sm:$0xff]
    %v172 = vld [vmem:[#allocation2 + $0x178] sm:$0xff]
    %v173 = vld [vmem:[#allocation2 + $0x180] sm:$0xff]
    %v174 = vld [vmem:[#allocation2 + $0x188] sm:$0xff]
    %v175 = vld [vmem:[#allocation2 + $0x190] sm:$0xff]
    %v176 = vld [vmem:[#allocation2 + $0x198] sm:$0xff]
    %v177 = vld [vmem:[#allocation2 + $0x1a0] sm:$0xff]
    %v178 = vld [vmem:[#allocation2 + $0x1a8] sm:$0xff]
    %v179 = vld [vmem:[#allocation2 + $0x1b0] sm:$0xff]
    %v180 = vld [vmem:[#allocation2 + $0x1b8] sm:$0xff]
    %v181 = vld [vmem:[#allocation2 + $0x1c0] sm:$0xff]
    %v182 = vld [vmem:[#allocation2 + $0x1c8] sm:$0xff]
    %v183 = vld [vmem:[#allocation2 + $0x1d0] sm:$0xff]
    %v184 = vld [vmem:[#allocation2 + $0x1d8] sm:$0xff]
    %v185 = vld [vmem:[#allocation2 + $0x1e0] sm:$0xff]
    %v186 = vld [vmem:[#allocation2 + $0x1e8] sm:$0xff]
    %v187 = vld [vmem:[#allocation2 + $0x1f0] sm:$0xff]
    %v188 = vld [vmem:[#allocation2 + $0x1f8] sm:$0xff]
    %v189 = vld [vmem:[#allocation2 + $0x200] sm:$0xff]
    %v190 = vld [vmem:[#allocation2 + $0x208] sm:$0xff]
    %v191 = vld [vmem:[#allocation2 + $0x210] sm:$0xff]
    %v192 = vld [vmem:[#allocation2 + $0x218] sm:$0xff]
    %v193 = vld [vmem:[#allocation2 + $0x220] sm:$0xff]
    %v194 = vld [vmem:[#allocation2 + $0x228] sm:$0xff]
    %v195 = vld [vmem:[#allocation2 + $0x230] sm:$0xff]
    %v196 = vld [vmem:[#allocation2 + $0x238] sm:$0xff]
    %v197 = vld [vmem:[#allocation2 + $0x240] sm:$0xff]
    %v198 = vld [vmem:[#allocation2 + $0x248] sm:$0xff]
    %v199 = vld [vmem:[#allocation2 + $0x250] sm:$0xff]
    %v200 = vld [vmem:[#allocation2 + $0x258] sm:$0xff]
    %v201 = vld [vmem:[#allocation2 + $0x260] sm:$0xff]
    %v202 = vld [vmem:[#allocation2 + $0x268] sm:$0xff]
    %v203 = vld [vmem:[#allocation2 + $0x270] sm:$0xff]
    %v204 = vld [vmem:[#allocation2 + $0x278] sm:$0xff]
    %v205 = vld [vmem:[#allocation2 + $0x280] sm:$0xff]
    %v206 = vld [vmem:[#allocation2 + $0x288] sm:$0xff]
    %v207 = vld [vmem:[#allocation2 + $0x290] sm:$0xff]
    %v208 = vld [vmem:[#allocation2 + $0x298] sm:$0xff]
    %v209 = vld [vmem:[#allocation2 + $0x2a0] sm:$0xff]
    %v210 = vld [vmem:[#allocation2 + $0x2a8] sm:$0xff]
    %v211 = vld [vmem:[#allocation2 + $0x2b0] sm:$0xff]
    %v212 = vld [vmem:[#allocation2 + $0x2b8] sm:$0xff]
    %v213 = vld [vmem:[#allocation2 + $0x2c0] sm:$0xff]
    %v214 = vld [vmem:[#allocation2 + $0x2c8] sm:$0xff]
    %v215 = vld [vmem:[#allocation2 + $0x2d0] sm:$0xff]
    %v216 = vld [vmem:[#allocation2 + $0x2d8] sm:$0xff]
    %v217 = vld [vmem:[#allocation2 + $0x2e0] sm:$0xff]
    %v218 = vld [vmem:[#allocation2 + $0x2e8] sm:$0xff]
    %v219 = vld [vmem:[#allocation2 + $0x2f0] sm:$0xff]
    %v220 = vld [vmem:[#allocation2 + $0x2f8] sm:$0xff]
    %v221 = vld [vmem:[%s2] sm:$0x3]
    %v223 = vlaneseq
    %v224 = vshrl.u32 %v223, 7
    %v225 = vsub.s32 0, %v224
    %v226 = vrot.slane %v221, %v225
    %v227 = vlaneseq
    %v228 = vshrl.u32 %v227, 7
    %v229 = vsub.s32 1, %v228
    %v230 = vrot.slane %v221, %v229
    %v329 = vunpack.c.l.b16 %v125
    %v330 = vunpack.c.h.b16 %v125
    %v331 = vunpack.c.l.b16 %v126
    %v332 = vunpack.c.h.b16 %v126
    %v333 = vunpack.c.l.b16 %v127
    %v334 = vunpack.c.h.b16 %v127
    %v335 = vunpack.c.l.b16 %v128
    %v336 = vunpack.c.h.b16 %v128
    %v337 = vunpack.c.l.b16 %v129
    %v338 = vunpack.c.h.b16 %v129
    %v339 = vunpack.c.l.b16 %v130
    %v340 = vunpack.c.h.b16 %v130
    %v341 = vunpack.c.l.b16 %v131
    %v342 = vunpack.c.h.b16 %v131
    %v343 = vunpack.c.l.b16 %v132
    %v344 = vunpack.c.h.b16 %v132
    %v345 = vunpack.c.l.b16 %v133
    %v346 = vunpack.c.h.b16 %v133
    %v347 = vunpack.c.l.b16 %v134
    %v348 = vunpack.c.h.b16 %v134
    %v349 = vunpack.c.l.b16 %v135
    %v350 = vunpack.c.h.b16 %v135
    %v351 = vunpack.c.l.b16 %v136
    %v352 = vunpack.c.h.b16 %v136
    %v353 = vunpack.c.l.b16 %v137
    %v354 = vunpack.c.h.b16 %v137
    %v355 = vunpack.c.l.b16 %v138
    %v356 = vunpack.c.h.b16 %v138
    %v357 = vunpack.c.l.b16 %v139
    %v358 = vunpack.c.h.b16 %v139
    %v359 = vunpack.c.l.b16 %v140
    %v360 = vunpack.c.h.b16 %v140
    %v361 = vunpack.c.l.b16 %v141
    %v362 = vunpack.c.h.b16 %v141
    %v363 = vunpack.c.l.b16 %v142
    %v364 = vunpack.c.h.b16 %v142
    %v365 = vunpack.c.l.b16 %v143
    %v366 = vunpack.c.h.b16 %v143
    %v367 = vunpack.c.l.b16 %v144
    %v368 = vunpack.c.h.b16 %v144
    %v369 = vunpack.c.l.b16 %v145
    %v370 = vunpack.c.h.b16 %v145
    %v371 = vunpack.c.l.b16 %v146
    %v372 = vunpack.c.h.b16 %v146
    %v373 = vunpack.c.l.b16 %v147
    %v374 = vunpack.c.h.b16 %v147
    %v375 = vunpack.c.l.b16 %v148
    %v376 = vunpack.c.h.b16 %v148
    %v377 = vunpack.c.l.b16 %v149
    %v378 = vunpack.c.h.b16 %v149
    %v379 = vunpack.c.l.b16 %v150
    %v380 = vunpack.c.h.b16 %v150
    %v381 = vunpack.c.l.b16 %v151
    %v382 = vunpack.c.h.b16 %v151
    %v383 = vunpack.c.l.b16 %v152
    %v384 = vunpack.c.h.b16 %v152
    %v385 = vunpack.c.l.b16 %v153
    %v386 = vunpack.c.h.b16 %v153
    %v387 = vunpack.c.l.b16 %v154
    %v388 = vunpack.c.h.b16 %v154
    %v389 = vunpack.c.l.b16 %v155
    %v390 = vunpack.c.h.b16 %v155
    %v391 = vunpack.c.l.b16 %v156
    %v392 = vunpack.c.h.b16 %v156
    %v393 = vunpack.c.l.b16 %v157
    %v394 = vunpack.c.h.b16 %v157
    %v395 = vunpack.c.l.b16 %v158
    %v396 = vunpack.c.h.b16 %v158
    %v397 = vunpack.c.l.b16 %v159
    %v398 = vunpack.c.h.b16 %v159
    %v399 = vunpack.c.l.b16 %v160
    %v400 = vunpack.c.h.b16 %v160
    %v401 = vunpack.c.l.b16 %v161
    %v402 = vunpack.c.h.b16 %v161
    %v403 = vunpack.c.l.b16 %v162
    %v404 = vunpack.c.h.b16 %v162
    %v405 = vunpack.c.l.b16 %v163
    %v406 = vunpack.c.h.b16 %v163
    %v407 = vunpack.c.l.b16 %v164
    %v408 = vunpack.c.h.b16 %v164
    %v409 = vunpack.c.l.b16 %v165
    %v410 = vunpack.c.h.b16 %v165
    %v411 = vunpack.c.l.b16 %v166
    %v412 = vunpack.c.h.b16 %v166
    %v413 = vunpack.c.l.b16 %v167
    %v414 = vunpack.c.h.b16 %v167
    %v415 = vunpack.c.l.b16 %v168
    %v416 = vunpack.c.h.b16 %v168
    %v417 = vunpack.c.l.b16 %v169
    %v418 = vunpack.c.h.b16 %v169
    %v419 = vunpack.c.l.b16 %v170
    %v420 = vunpack.c.h.b16 %v170
    %v421 = vunpack.c.l.b16 %v171
    %v422 = vunpack.c.h.b16 %v171
    %v423 = vunpack.c.l.b16 %v172
    %v424 = vunpack.c.h.b16 %v172
    %v425 = vunpack.c.l.b16 %v173
    %v426 = vunpack.c.h.b16 %v173
    %v427 = vunpack.c.l.b16 %v174
    %v428 = vunpack.c.h.b16 %v174
    %v429 = vunpack.c.l.b16 %v175
    %v430 = vunpack.c.h.b16 %v175
    %v431 = vunpack.c.l.b16 %v176
    %v432 = vunpack.c.h.b16 %v176
    %v433 = vunpack.c.l.b16 %v177
    %v434 = vunpack.c.h.b16 %v177
    %v435 = vunpack.c.l.b16 %v178
    %v436 = vunpack.c.h.b16 %v178
    %v437 = vunpack.c.l.b16 %v179
    %v438 = vunpack.c.h.b16 %v179
    %v439 = vunpack.c.l.b16 %v180
    %v440 = vunpack.c.h.b16 %v180
    %v441 = vunpack.c.l.b16 %v181
    %v442 = vunpack.c.h.b16 %v181
    %v443 = vunpack.c.l.b16 %v182
    %v444 = vunpack.c.h.b16 %v182
    %v445 = vunpack.c.l.b16 %v183
    %v446 = vunpack.c.h.b16 %v183
    %v447 = vunpack.c.l.b16 %v184
    %v448 = vunpack.c.h.b16 %v184
    %v449 = vunpack.c.l.b16 %v185
    %v450 = vunpack.c.h.b16 %v185
    %v451 = vunpack.c.l.b16 %v186
    %v452 = vunpack.c.h.b16 %v186
    %v453 = vunpack.c.l.b16 %v187
    %v454 = vunpack.c.h.b16 %v187
    %v455 = vunpack.c.l.b16 %v188
    %v456 = vunpack.c.h.b16 %v188
    %v457 = vunpack.c.l.b16 %v189
    %v458 = vunpack.c.h.b16 %v189
    %v459 = vunpack.c.l.b16 %v190
    %v460 = vunpack.c.h.b16 %v190
    %v461 = vunpack.c.l.b16 %v191
    %v462 = vunpack.c.h.b16 %v191
    %v463 = vunpack.c.l.b16 %v192
    %v464 = vunpack.c.h.b16 %v192
    %v465 = vunpack.c.l.b16 %v193
    %v466 = vunpack.c.h.b16 %v193
    %v467 = vunpack.c.l.b16 %v194
    %v468 = vunpack.c.h.b16 %v194
    %v469 = vunpack.c.l.b16 %v195
    %v470 = vunpack.c.h.b16 %v195
    %v471 = vunpack.c.l.b16 %v196
    %v472 = vunpack.c.h.b16 %v196
    %v473 = vunpack.c.l.b16 %v197
    %v474 = vunpack.c.h.b16 %v197
    %v475 = vunpack.c.l.b16 %v198
    %v476 = vunpack.c.h.b16 %v198
    %v477 = vunpack.c.l.b16 %v199
    %v478 = vunpack.c.h.b16 %v199
    %v479 = vunpack.c.l.b16 %v200
    %v480 = vunpack.c.h.b16 %v200
    %v481 = vunpack.c.l.b16 %v201
    %v482 = vunpack.c.h.b16 %v201
    %v483 = vunpack.c.l.b16 %v202
    %v484 = vunpack.c.h.b16 %v202
    %v485 = vunpack.c.l.b16 %v203
    %v486 = vunpack.c.h.b16 %v203
    %v487 = vunpack.c.l.b16 %v204
    %v488 = vunpack.c.h.b16 %v204
    %v489 = vunpack.c.l.b16 %v205
    %v490 = vunpack.c.h.b16 %v205
    %v491 = vunpack.c.l.b16 %v206
    %v492 = vunpack.c.h.b16 %v206
    %v493 = vunpack.c.l.b16 %v207
    %v494 = vunpack.c.h.b16 %v207
    %v495 = vunpack.c.l.b16 %v208
    %v496 = vunpack.c.h.b16 %v208
    %v497 = vunpack.c.l.b16 %v209
    %v498 = vunpack.c.h.b16 %v209
    %v499 = vunpack.c.l.b16 %v210
    %v500 = vunpack.c.h.b16 %v210
    %v501 = vunpack.c.l.b16 %v211
    %v502 = vunpack.c.h.b16 %v211
    %v503 = vunpack.c.l.b16 %v212
    %v504 = vunpack.c.h.b16 %v212
    %v505 = vunpack.c.l.b16 %v213
    %v506 = vunpack.c.h.b16 %v213
    %v507 = vunpack.c.l.b16 %v214
    %v508 = vunpack.c.h.b16 %v214
    %v509 = vunpack.c.l.b16 %v215
    %v510 = vunpack.c.h.b16 %v215
    %v511 = vunpack.c.l.b16 %v216
    %v512 = vunpack.c.h.b16 %v216
    %v513 = vunpack.c.l.b16 %v217
    %v514 = vunpack.c.h.b16 %v217
    %v515 = vunpack.c.l.b16 %v218
    %v516 = vunpack.c.h.b16 %v218
    %v517 = vunpack.c.l.b16 %v219
    %v518 = vunpack.c.h.b16 %v219
    %v519 = vunpack.c.l.b16 %v220
    %v520 = vunpack.c.h.b16 %v220
    %v521 = vpack.c.b16 %v331, %v329
    %v522 = vpack.c.b16 %v332, %v330
    %v523 = vpack.c.b16 %v335, %v333
    %v524 = vpack.c.b16 %v336, %v334
    %v525 = vpack.c.b16 %v339, %v337
    %v526 = vpack.c.b16 %v340, %v338
    %v527 = vpack.c.b16 %v343, %v341
    %v528 = vpack.c.b16 %v344, %v342
    %v529 = vpack.c.b16 %v347, %v345
    %v530 = vpack.c.b16 %v348, %v346
    %v531 = vpack.c.b16 %v351, %v349
    %v532 = vpack.c.b16 %v352, %v350
    %v533 = vpack.c.b16 %v355, %v353
    %v534 = vpack.c.b16 %v356, %v354
    %v535 = vpack.c.b16 %v359, %v357
    %v536 = vpack.c.b16 %v360, %v358
    %v537 = vpack.c.b16 %v363, %v361
    %v538 = vpack.c.b16 %v364, %v362
    %v539 = vpack.c.b16 %v367, %v365
    %v540 = vpack.c.b16 %v368, %v366
    %v541 = vpack.c.b16 %v371, %v369
    %v542 = vpack.c.b16 %v372, %v370
    %v543 = vpack.c.b16 %v375, %v373
    %v544 = vpack.c.b16 %v376, %v374
    %v545 = vpack.c.b16 %v379, %v377
    %v546 = vpack.c.b16 %v380, %v378
    %v547 = vpack.c.b16 %v383, %v381
    %v548 = vpack.c.b16 %v384, %v382
    %v549 = vpack.c.b16 %v387, %v385
    %v550 = vpack.c.b16 %v388, %v386
    %v551 = vpack.c.b16 %v391, %v389
    %v552 = vpack.c.b16 %v392, %v390
    %v553 = vpack.c.b16 %v395, %v393
    %v554 = vpack.c.b16 %v396, %v394
    %v555 = vpack.c.b16 %v399, %v397
    %v556 = vpack.c.b16 %v400, %v398
    %v557 = vpack.c.b16 %v403, %v401
    %v558 = vpack.c.b16 %v404, %v402
    %v559 = vpack.c.b16 %v407, %v405
    %v560 = vpack.c.b16 %v408, %v406
    %v561 = vpack.c.b16 %v411, %v409
    %v562 = vpack.c.b16 %v412, %v410
    %v563 = vpack.c.b16 %v415, %v413
    %v564 = vpack.c.b16 %v416, %v414
    %v565 = vpack.c.b16 %v419, %v417
    %v566 = vpack.c.b16 %v420, %v418
    %v567 = vpack.c.b16 %v423, %v421
    %v568 = vpack.c.b16 %v424, %v422
    %v569 = vpack.c.b16 %v427, %v425
    %v570 = vpack.c.b16 %v428, %v426
    %v571 = vpack.c.b16 %v431, %v429
    %v572 = vpack.c.b16 %v432, %v430
    %v573 = vpack.c.b16 %v435, %v433
    %v574 = vpack.c.b16 %v436, %v434
    %v575 = vpack.c.b16 %v439, %v437
    %v576 = vpack.c.b16 %v440, %v438
    %v577 = vpack.c.b16 %v443, %v441
    %v578 = vpack.c.b16 %v444, %v442
    %v579 = vpack.c.b16 %v447, %v445
    %v580 = vpack.c.b16 %v448, %v446
    %v581 = vpack.c.b16 %v451, %v449
    %v582 = vpack.c.b16 %v452, %v450
    %v583 = vpack.c.b16 %v455, %v453
    %v584 = vpack.c.b16 %v456, %v454
    %v585 = vpack.c.b16 %v459, %v457
    %v586 = vpack.c.b16 %v460, %v458
    %v587 = vpack.c.b16 %v463, %v461
    %v588 = vpack.c.b16 %v464, %v462
    %v589 = vpack.c.b16 %v467, %v465
    %v590 = vpack.c.b16 %v468, %v466
    %v591 = vpack.c.b16 %v471, %v469
    %v592 = vpack.c.b16 %v472, %v470
    %v593 = vpack.c.b16 %v475, %v473
    %v594 = vpack.c.b16 %v476, %v474
    %v595 = vpack.c.b16 %v479, %v477
    %v596 = vpack.c.b16 %v480, %v478
    %v597 = vpack.c.b16 %v483, %v481
    %v598 = vpack.c.b16 %v484, %v482
    %v599 = vpack.c.b16 %v487, %v485
    %v600 = vpack.c.b16 %v488, %v486
    %v601 = vpack.c.b16 %v491, %v489
    %v602 = vpack.c.b16 %v492, %v490
    %v603 = vpack.c.b16 %v495, %v493
    %v604 = vpack.c.b16 %v496, %v494
    %v605 = vpack.c.b16 %v499, %v497
    %v606 = vpack.c.b16 %v500, %v498
    %v607 = vpack.c.b16 %v503, %v501
    %v608 = vpack.c.b16 %v504, %v502
    %v609 = vpack.c.b16 %v507, %v505
    %v610 = vpack.c.b16 %v508, %v506
    %v611 = vpack.c.b16 %v511, %v509
    %v612 = vpack.c.b16 %v512, %v510
    %v613 = vpack.c.b16 %v515, %v513
    %v614 = vpack.c.b16 %v516, %v514
    %v615 = vpack.c.b16 %v519, %v517
    %v616 = vpack.c.b16 %v520, %v518
    %713 = vmatprep.subr.bf16.mxu0 %v522
    %714 = vmatpush1.bf16.msra.mxu0 %v521
    %715 = vmatprep.subr.bf16.mxu0 %v524
    %716 = vmatpush1.bf16.msra.mxu0 %v523
    %717 = vmatprep.subr.bf16.mxu0 %v526
    %718 = vmatpush1.bf16.msra.mxu0 %v525
    %719 = vmatprep.subr.bf16.mxu0 %v528
    %720 = vmatpush1.bf16.msra.mxu0 %v527
    %721 = vmatprep.subr.bf16.mxu0 %v530
    %722 = vmatpush1.bf16.msra.mxu0 %v529
    %723 = vmatprep.subr.bf16.mxu0 %v532
    %724 = vmatpush1.bf16.msra.mxu0 %v531
    %725 = vmatprep.subr.bf16.mxu0 %v534
    %726 = vmatpush1.bf16.msra.mxu0 %v533
    %727 = vmatprep.subr.bf16.mxu0 %v536
    %728 = vmatpush1.bf16.msra.mxu0 %v535
    %729 = vmatprep.subr.bf16.mxu0 %v538
    %730 = vmatpush1.bf16.msra.mxu0 %v537
    %731 = vmatprep.subr.bf16.mxu0 %v540
    %732 = vmatpush1.bf16.msra.mxu0 %v539
    %733 = vmatprep.subr.bf16.mxu0 %v542
    %734 = vmatpush1.bf16.msra.mxu0 %v541
    %735 = vmatprep.subr.bf16.mxu0 %v544
    %736 = vmatpush1.bf16.msra.mxu0 %v543
    %737 = vmatprep.subr.bf16.mxu0 %v546
    %738 = vmatpush1.bf16.msra.mxu0 %v545
    %739 = vmatprep.subr.bf16.mxu0 %v548
    %740 = vmatpush1.bf16.msra.mxu0 %v547
    %741 = vmatprep.subr.bf16.mxu0 %v550
    %742 = vmatpush1.bf16.msra.mxu0 %v549
    %743 = vmatprep.subr.bf16.mxu0 %v552
    %744 = vmatpush1.bf16.msra.mxu0 %v551
    %745 = vmatprep.mubr.bf16.mxu0 %v120
    %746 = vmatmul.mubr.bf16.gmra.mrb[0].mxu0 %v119
    %v747 = vpop.f32.mrb[0].mxu0
    %v748 = vadd.f32 %v226, %v747
    %v749 = vpop.f32.mrb[0].mxu0
    %v750 = vadd.f32 %v230, %v749
    %v751 = vpop.f32.mrb[0].mxu0
    %v752 = vpop.f32.mrb[0].mxu0
    %753 = vdwg.mxu0
    %754 = vmatprep.subr.bf16.mxu0 %v554
    %755 = vmatpush1.bf16.msra.mxu0 %v553
    %756 = vmatprep.subr.bf16.mxu0 %v556
    %757 = vmatpush1.bf16.msra.mxu0 %v555
    %758 = vmatprep.subr.bf16.mxu0 %v558
    %759 = vmatpush1.bf16.msra.mxu0 %v557
    %760 = vmatprep.subr.bf16.mxu0 %v560
    %761 = vmatpush1.bf16.msra.mxu0 %v559
    %762 = vmatprep.subr.bf16.mxu0 %v562
    %763 = vmatpush1.bf16.msra.mxu0 %v561
    %764 = vmatprep.subr.bf16.mxu0 %v564
    %765 = vmatpush1.bf16.msra.mxu0 %v563
    %766 = vmatprep.subr.bf16.mxu0 %v566
    %767 = vmatpush1.bf16.msra.mxu0 %v565
    %768 = vmatprep.subr.bf16.mxu0 %v568
    %769 = vmatpush1.bf16.msra.mxu0 %v567
    %770 = vmatprep.subr.bf16.mxu0 %v570
    %771 = vmatpush1.bf16.msra.mxu0 %v569
    %772 = vmatprep.subr.bf16.mxu0 %v572
    %773 = vmatpush1.bf16.msra.mxu0 %v571
    %774 = vmatprep.subr.bf16.mxu0 %v574
    %775 = vmatpush1.bf16.msra.mxu0 %v573
    %776 = vmatprep.subr.bf16.mxu0 %v576
    %777 = vmatpush1.bf16.msra.mxu0 %v575
    %778 = vmatprep.subr.bf16.mxu0 %v578
    %779 = vmatpush1.bf16.msra.mxu0 %v577
    %780 = vmatprep.subr.bf16.mxu0 %v580
    %781 = vmatpush1.bf16.msra.mxu0 %v579
    %782 = vmatprep.subr.bf16.mxu0 %v582
    %783 = vmatpush1.bf16.msra.mxu0 %v581
    %784 = vmatprep.subr.bf16.mxu0 %v584
    %785 = vmatpush1.bf16.msra.mxu0 %v583
    %786 = vmatprep.mubr.bf16.mxu0 %v122
    %787 = vmatmul.mubr.bf16.gmra.mrb[0].mxu0 %v121
    %v788 = vpop.f32.mrb[0].mxu0
    %v789 = vadd.f32 %v748, %v788
    %v790 = vpop.f32.mrb[0].mxu0
    %v791 = vadd.f32 %v750, %v790
    %v792 = vpop.f32.mrb[0].mxu0
    %v793 = vpop.f32.mrb[0].mxu0
    %794 = vdwg.mxu0
    %795 = vmatprep.subr.bf16.mxu0 %v586
    %796 = vmatpush1.bf16.msra.mxu0 %v585
    %797 = vmatprep.subr.bf16.mxu0 %v588
    %798 = vmatpush1.bf16.msra.mxu0 %v587
    %799 = vmatprep.subr.bf16.mxu0 %v590
    %800 = vmatpush1.bf16.msra.mxu0 %v589
    %801 = vmatprep.subr.bf16.mxu0 %v592
    %802 = vmatpush1.bf16.msra.mxu0 %v591
    %803 = vmatprep.subr.bf16.mxu0 %v594
    %804 = vmatpush1.bf16.msra.mxu0 %v593
    %805 = vmatprep.subr.bf16.mxu0 %v596
    %806 = vmatpush1.bf16.msra.mxu0 %v595
    %807 = vmatprep.subr.bf16.mxu0 %v598
    %808 = vmatpush1.bf16.msra.mxu0 %v597
    %809 = vmatprep.subr.bf16.mxu0 %v600
    %810 = vmatpush1.bf16.msra.mxu0 %v599
    %811 = vmatprep.subr.bf16.mxu0 %v602
    %812 = vmatpush1.bf16.msra.mxu0 %v601
    %813 = vmatprep.subr.bf16.mxu0 %v604
    %814 = vmatpush1.bf16.msra.mxu0 %v603
    %815 = vmatprep.subr.bf16.mxu0 %v606
    %816 = vmatpush1.bf16.msra.mxu0 %v605
    %817 = vmatprep.subr.bf16.mxu0 %v608
    %818 = vmatpush1.bf16.msra.mxu0 %v607
    %819 = vmatprep.subr.bf16.mxu0 %v610
    %820 = vmatpush1.bf16.msra.mxu0 %v609
    %821 = vmatprep.subr.bf16.mxu0 %v612
    %822 = vmatpush1.bf16.msra.mxu0 %v611
    %823 = vmatprep.subr.bf16.mxu0 %v614
    %824 = vmatpush1.bf16.msra.mxu0 %v613
    %825 = vmatprep.subr.bf16.mxu0 %v616
    %826 = vmatpush1.bf16.msra.mxu0 %v615
    %827 = vmatprep.mubr.bf16.mxu0 %v124
    %828 = vmatmul.mubr.bf16.gmra.mrb[0].mxu0 %v123
    %v829 = vpop.f32.mrb[0].mxu0
    %v830 = vadd.f32 %v789, %v829
    %v831 = vpop.f32.mrb[0].mxu0
    %v832 = vadd.f32 %v791, %v831
    %v833 = vpop.f32.mrb[0].mxu0
    %v834 = vpop.f32.mrb[0].mxu0
    %835 = vdwg.mxu0
    %v836 = vmax.f32 %v830, 0.0
    %v837 = vmax.f32 %v832, 0.0
    %v838 = vpack.c.bf16 %v836, %v836
    %v839 = vpack.c.bf16 %v837, %v837
    %v840 = vld [vmem:[%s3] sm:$0xf]
    %v841 = vld [vmem:[%s3 + $0x4] sm:$0xf]
    %v842 = vld [vmem:[%s3 + $0x8] sm:$0xf]
    %v843 = vld [vmem:[%s3 + $0xc] sm:$0xf]
    %v844 = vld [vmem:[%s3 + $0x10] sm:$0xf]
    %v845 = vld [vmem:[%s3 + $0x14] sm:$0xf]
    %v846 = vld [vmem:[%s3 + $0x18] sm:$0xf]
    %v847 = vld [vmem:[%s3 + $0x1c] sm:$0xf]
    %v848 = vld [vmem:[%s3 + $0x20] sm:$0xf]
    %v849 = vld [vmem:[%s3 + $0x24] sm:$0xf]
    %v850 = vld [vmem:[%s3 + $0x28] sm:$0xf]
    %v851 = vld [vmem:[%s3 + $0x2c] sm:$0xf]
    %v852 = vld [vmem:[%s3 + $0x30] sm:$0xf]
    %v853 = vld [vmem:[%s3 + $0x34] sm:$0xf]
    %v854 = vld [vmem:[%s3 + $0x38] sm:$0xf]
    %v855 = vld [vmem:[%s3 + $0x3c] sm:$0xf]
    %v856 = vld [vmem:[%s3 + $0x40] sm:$0xf]
    %v857 = vld [vmem:[%s3 + $0x44] sm:$0xf]
    %v858 = vld [vmem:[%s3 + $0x48] sm:$0xf]
    %v859 = vld [vmem:[%s3 + $0x4c] sm:$0xf]
    %v860 = vld [vmem:[%s3 + $0x50] sm:$0xf]
    %v861 = vld [vmem:[%s3 + $0x54] sm:$0xf]
    %v862 = vld [vmem:[%s3 + $0x58] sm:$0xf]
    %v863 = vld [vmem:[%s3 + $0x5c] sm:$0xf]
    %v864 = vld [vmem:[%s3 + $0x60] sm:$0xf]
    %v865 = vld [vmem:[%s3 + $0x64] sm:$0xf]
    %v866 = vld [vmem:[%s3 + $0x68] sm:$0xf]
    %v867 = vld [vmem:[%s3 + $0x6c] sm:$0xf]
    %v868 = vld [vmem:[%s3 + $0x70] sm:$0xf]
    %v869 = vld [vmem:[%s3 + $0x74] sm:$0xf]
    %v870 = vld [vmem:[%s3 + $0x78] sm:$0xf]
    %v871 = vld [vmem:[%s3 + $0x7c] sm:$0xf]
    %v872 = vld [vmem:[%s4] sm:$0x1]
    %v874 = vlaneseq
    %v875 = vshrl.u32 %v874, 7
    %v876 = vsub.s32 0, %v875
    %v877 = vrot.slane %v872, %v876
    %v911 = vunpack.c.l.b16 %v840
    %v912 = vunpack.c.l.b16 %v841
    %v913 = vunpack.c.l.b16 %v842
    %v914 = vunpack.c.l.b16 %v843
    %v915 = vunpack.c.l.b16 %v844
    %v916 = vunpack.c.l.b16 %v845
    %v917 = vunpack.c.l.b16 %v846
    %v918 = vunpack.c.l.b16 %v847
    %v919 = vunpack.c.l.b16 %v848
    %v920 = vunpack.c.l.b16 %v849
    %v921 = vunpack.c.l.b16 %v850
    %v922 = vunpack.c.l.b16 %v851
    %v923 = vunpack.c.l.b16 %v852
    %v924 = vunpack.c.l.b16 %v853
    %v925 = vunpack.c.l.b16 %v854
    %v926 = vunpack.c.l.b16 %v855
    %v927 = vunpack.c.l.b16 %v856
    %v928 = vunpack.c.l.b16 %v857
    %v929 = vunpack.c.l.b16 %v858
    %v930 = vunpack.c.l.b16 %v859
    %v931 = vunpack.c.l.b16 %v860
    %v932 = vunpack.c.l.b16 %v861
    %v933 = vunpack.c.l.b16 %v862
    %v934 = vunpack.c.l.b16 %v863
    %v935 = vunpack.c.l.b16 %v864
    %v936 = vunpack.c.l.b16 %v865
    %v937 = vunpack.c.l.b16 %v866
    %v938 = vunpack.c.l.b16 %v867
    %v939 = vunpack.c.l.b16 %v868
    %v940 = vunpack.c.l.b16 %v869
    %v941 = vunpack.c.l.b16 %v870
    %v942 = vunpack.c.l.b16 %v871
    %v943 = vpack.c.b16 %v912, %v911
    %v944 = vpack.c.b16 %v914, %v913
    %v945 = vpack.c.b16 %v916, %v915
    %v946 = vpack.c.b16 %v918, %v917
    %v947 = vpack.c.b16 %v920, %v919
    %v948 = vpack.c.b16 %v922, %v921
    %v949 = vpack.c.b16 %v924, %v923
    %v950 = vpack.c.b16 %v926, %v925
    %v951 = vpack.c.b16 %v928, %v927
    %v952 = vpack.c.b16 %v930, %v929
    %v953 = vpack.c.b16 %v932, %v931
    %v954 = vpack.c.b16 %v934, %v933
    %v955 = vpack.c.b16 %v936, %v935
    %v956 = vpack.c.b16 %v938, %v937
    %v957 = vpack.c.b16 %v940, %v939
    %v958 = vpack.c.b16 %v942, %v941
    %975 = vmatprep.subr.bf16.mxu0 0
    %976 = vmatpush1.bf16.msra.mxu0 %v943
    %977 = vmatprep.subr.bf16.mxu0 0
    %978 = vmatpush1.bf16.msra.mxu0 %v944
    %979 = vmatprep.subr.bf16.mxu0 0
    %980 = vmatpush1.bf16.msra.mxu0 %v945
    %981 = vmatprep.subr.bf16.mxu0 0
    %982 = vmatpush1.bf16.msra.mxu0 %v946
    %983 = vmatprep.subr.bf16.mxu0 0
    %984 = vmatpush1.bf16.msra.mxu0 %v947
    %985 = vmatprep.subr.bf16.mxu0 0
    %986 = vmatpush1.bf16.msra.mxu0 %v948
    %987 = vmatprep.subr.bf16.mxu0 0
    %988 = vmatpush1.bf16.msra.mxu0 %v949
    %989 = vmatprep.subr.bf16.mxu0 0
    %990 = vmatpush1.bf16.msra.mxu0 %v950
    %991 = vmatprep.subr.bf16.mxu0 0
    %992 = vmatpush1.bf16.msra.mxu0 %v951
    %993 = vmatprep.subr.bf16.mxu0 0
    %994 = vmatpush1.bf16.msra.mxu0 %v952
    %995 = vmatprep.subr.bf16.mxu0 0
    %996 = vmatpush1.bf16.msra.mxu0 %v953
    %997 = vmatprep.subr.bf16.mxu0 0
    %998 = vmatpush1.bf16.msra.mxu0 %v954
    %999 = vmatprep.subr.bf16.mxu0 0
    %1000 = vmatpush1.bf16.msra.mxu0 %v955
    %1001 = vmatprep.subr.bf16.mxu0 0
    %1002 = vmatpush1.bf16.msra.mxu0 %v956
    %1003 = vmatprep.subr.bf16.mxu0 0
    %1004 = vmatpush1.bf16.msra.mxu0 %v957
    %1005 = vmatprep.subr.bf16.mxu0 0
    %1006 = vmatpush1.bf16.msra.mxu0 %v958
    %1007 = vmatprep.mubr.bf16.mxu0 %v839
    %1008 = vmatmul.mubr.bf16.gmra.mrb[0].mxu0 %v838
    %v1009 = vpop.f32.mrb[0].mxu0
    %v1010 = vadd.f32 %v877, %v1009
    %v1011 = vpop.f32.mrb[0].mxu0
    %v1012 = vpop.f32.mrb[0].mxu0
    %v1013 = vpop.f32.mrb[0].mxu0
    %1014 = vdwg.mxu0
    %v1015 = vmax.f32 %v1010, 0.0
    %v1016 = vpack.c.bf16 %v1015, %v1015
    %v1017 = vld [vmem:[#allocation4] sm:$0xf]
    %v1018 = vld [vmem:[#allocation4 + $0x4] sm:$0xf]
    %v1019 = vld [vmem:[#allocation4 + $0x8] sm:$0xf]
    %v1020 = vld [vmem:[#allocation4 + $0xc] sm:$0xf]
    %v1021 = vld [vmem:[#allocation4 + $0x10] sm:$0xf]
    %v1022 = vld [vmem:[#allocation4 + $0x14] sm:$0xf]
    %v1023 = vld [vmem:[#allocation4 + $0x18] sm:$0xf]
    %v1024 = vld [vmem:[#allocation4 + $0x1c] sm:$0xf]
    %v1025 = vld [vmem:[#allocation4 + $0x20] sm:$0xf]
    %v1026 = vld [vmem:[#allocation4 + $0x24] sm:$0xf]
    %v1027 = vld [vmem:[#allocation4 + $0x28] sm:$0xf]
    %v1028 = vld [vmem:[#allocation4 + $0x2c] sm:$0xf]
    %v1029 = vld [vmem:[#allocation4 + $0x30] sm:$0xf]
    %v1030 = vld [vmem:[#allocation4 + $0x34] sm:$0xf]
    %v1031 = vld [vmem:[#allocation4 + $0x38] sm:$0xf]
    %v1032 = vld [vmem:[#allocation4 + $0x3c] sm:$0xf]
    %v1033 = vld [vmem:[%s6] sm:$0x1]
    %v1035 = vlaneseq
    %v1036 = vshrl.u32 %v1035, 7
    %v1037 = vsub.s32 0, %v1036
    %v1038 = vrot.slane %v1033, %v1037
    %v1056 = vunpack.c.l.b16 %v1017
    %v1057 = vunpack.c.l.b16 %v1018
    %v1058 = vunpack.c.l.b16 %v1019
    %v1059 = vunpack.c.l.b16 %v1020
    %v1060 = vunpack.c.l.b16 %v1021
    %v1061 = vunpack.c.l.b16 %v1022
    %v1062 = vunpack.c.l.b16 %v1023
    %v1063 = vunpack.c.l.b16 %v1024
    %v1064 = vunpack.c.l.b16 %v1025
    %v1065 = vunpack.c.l.b16 %v1026
    %v1066 = vunpack.c.l.b16 %v1027
    %v1067 = vunpack.c.l.b16 %v1028
    %v1068 = vunpack.c.l.b16 %v1029
    %v1069 = vunpack.c.l.b16 %v1030
    %v1070 = vunpack.c.l.b16 %v1031
    %v1071 = vunpack.c.l.b16 %v1032
    %v1072 = vpack.c.b16 %v1057, %v1056
    %v1073 = vpack.c.b16 %v1059, %v1058
    %v1074 = vpack.c.b16 %v1061, %v1060
    %v1075 = vpack.c.b16 %v1063, %v1062
    %v1076 = vpack.c.b16 %v1065, %v1064
    %v1077 = vpack.c.b16 %v1067, %v1066
    %v1078 = vpack.c.b16 %v1069, %v1068
    %v1079 = vpack.c.b16 %v1071, %v1070
    %1088 = vmatprep.subr.bf16.mxu0 0
    %1089 = vmatpush1.bf16.msra.mxu0 %v1072
    %1090 = vmatprep.subr.bf16.mxu0 0
    %1091 = vmatpush1.bf16.msra.mxu0 %v1073
    %1092 = vmatprep.subr.bf16.mxu0 0
    %1093 = vmatpush1.bf16.msra.mxu0 %v1074
    %1094 = vmatprep.subr.bf16.mxu0 0
    %1095 = vmatpush1.bf16.msra.mxu0 %v1075
    %1096 = vmatprep.subr.bf16.mxu0 0
    %1097 = vmatpush1.bf16.msra.mxu0 %v1076
    %1098 = vmatprep.subr.bf16.mxu0 0
    %1099 = vmatpush1.bf16.msra.mxu0 %v1077
    %1100 = vmatprep.subr.bf16.mxu0 0
    %1101 = vmatpush1.bf16.msra.mxu0 %v1078
    %1102 = vmatprep.subr.bf16.mxu0 0
    %1103 = vmatpush1.bf16.msra.mxu0 %v1079
    %1104 = vmatprep.subr.bf16.mxu0 0
    %1105 = vmatpush1.bf16.msra.mxu0 0
    %1106 = vmatprep.subr.bf16.mxu0 0
    %1107 = vmatpush1.bf16.msra.mxu0 0
    %1108 = vmatprep.subr.bf16.mxu0 0
    %1109 = vmatpush1.bf16.msra.mxu0 0
    %1110 = vmatprep.subr.bf16.mxu0 0
    %1111 = vmatpush1.bf16.msra.mxu0 0
    %1112 = vmatprep.subr.bf16.mxu0 0
    %1113 = vmatpush1.bf16.msra.mxu0 0
    %1114 = vmatprep.subr.bf16.mxu0 0
    %1115 = vmatpush1.bf16.msra.mxu0 0
    %1116 = vmatprep.subr.bf16.mxu0 0
    %1117 = vmatpush1.bf16.msra.mxu0 0
    %1118 = vmatprep.subr.bf16.mxu0 0
    %1119 = vmatpush1.bf16.msra.mxu0 0
    %1120 = vmatprep.mubr.bf16.mxu0 0
    %1121 = vmatmul.mubr.bf16.gmra.mrb[0].mxu0 %v1016
    %v1122 = vpop.f32.mrb[0].mxu0
    %v1123 = vadd.f32 %v1038, %v1122
    %v1124 = vpop.f32.mrb[0].mxu0
    %v1125 = vpop.f32.mrb[0].mxu0
    %v1126 = vpop.f32.mrb[0].mxu0
    %1127 = vdwg.mxu0
    %v1128 = vmax.f32 %v1123, 0.0
    %v1129 = vpack.c.bf16 %v1128, %v1128
    %v1130 = vld [vmem:[#allocation6] sm:$0xf]
    %v1131 = vld [vmem:[#allocation6 + $0x4] sm:$0xf]
    %v1132 = vld [vmem:[#allocation6 + $0x8] sm:$0xf]
    %v1133 = vld [vmem:[#allocation6 + $0xc] sm:$0xf]
    %v1134 = vld [vmem:[#allocation6 + $0x10] sm:$0xf]
    %v1135 = vld [vmem:[#allocation6 + $0x14] sm:$0xf]
    %v1136 = vld [vmem:[#allocation6 + $0x18] sm:$0xf]
    %v1137 = vld [vmem:[#allocation6 + $0x1c] sm:$0xf]
    %v1138 = vld [vmem:[#allocation6 + $0x20] sm:$0xf]
    %v1139 = vld [vmem:[#allocation6 + $0x24] sm:$0xf]
    %v1140 = vld [vmem:[#allocation6 + $0x28] sm:$0xf]
    %v1141 = vld [vmem:[#allocation6 + $0x2c] sm:$0xf]
    %v1142 = vld [vmem:[#allocation6 + $0x30] sm:$0xf]
    %v1143 = vld [vmem:[#allocation6 + $0x34] sm:$0xf]
    %v1144 = vld [vmem:[#allocation6 + $0x38] sm:$0xf]
    %v1145 = vld [vmem:[#allocation6 + $0x3c] sm:$0xf]
    %v1146 = vld [vmem:[%s8] sm:$0x1]
    %v1148 = vlaneseq
    %v1149 = vshrl.u32 %v1148, 7
    %v1150 = vsub.s32 0, %v1149
    %v1151 = vrot.slane %v1146, %v1150
    %v1169 = vunpack.c.l.b16 %v1130
    %v1170 = vunpack.c.l.b16 %v1131
    %v1171 = vunpack.c.l.b16 %v1132
    %v1172 = vunpack.c.l.b16 %v1133
    %v1173 = vunpack.c.l.b16 %v1134
    %v1174 = vunpack.c.l.b16 %v1135
    %v1175 = vunpack.c.l.b16 %v1136
    %v1176 = vunpack.c.l.b16 %v1137
    %v1177 = vunpack.c.l.b16 %v1138
    %v1178 = vunpack.c.l.b16 %v1139
    %v1179 = vunpack.c.l.b16 %v1140
    %v1180 = vunpack.c.l.b16 %v1141
    %v1181 = vunpack.c.l.b16 %v1142
    %v1182 = vunpack.c.l.b16 %v1143
    %v1183 = vunpack.c.l.b16 %v1144
    %v1184 = vunpack.c.l.b16 %v1145
    %v1185 = vpack.c.b16 %v1170, %v1169
    %v1186 = vpack.c.b16 %v1172, %v1171
    %v1187 = vpack.c.b16 %v1174, %v1173
    %v1188 = vpack.c.b16 %v1176, %v1175
    %v1189 = vpack.c.b16 %v1178, %v1177
    %v1190 = vpack.c.b16 %v1180, %v1179
    %v1191 = vpack.c.b16 %v1182, %v1181
    %v1192 = vpack.c.b16 %v1184, %v1183
    %1201 = vmatprep.subr.bf16.mxu0 0
    %1202 = vmatpush1.bf16.msra.mxu0 %v1185
    %1203 = vmatprep.subr.bf16.mxu0 0
    %1204 = vmatpush1.bf16.msra.mxu0 %v1186
    %1205 = vmatprep.subr.bf16.mxu0 0
    %1206 = vmatpush1.bf16.msra.mxu0 %v1187
    %1207 = vmatprep.subr.bf16.mxu0 0
    %1208 = vmatpush1.bf16.msra.mxu0 %v1188
    %1209 = vmatprep.subr.bf16.mxu0 0
    %1210 = vmatpush1.bf16.msra.mxu0 %v1189
    %1211 = vmatprep.subr.bf16.mxu0 0
    %1212 = vmatpush1.bf16.msra.mxu0 %v1190
    %1213 = vmatprep.subr.bf16.mxu0 0
    %1214 = vmatpush1.bf16.msra.mxu0 %v1191
    %1215 = vmatprep.subr.bf16.mxu0 0
    %1216 = vmatpush1.bf16.msra.mxu0 %v1192
    %1217 = vmatprep.subr.bf16.mxu0 0
    %1218 = vmatpush1.bf16.msra.mxu0 0
    %1219 = vmatprep.subr.bf16.mxu0 0
    %1220 = vmatpush1.bf16.msra.mxu0 0
    %1221 = vmatprep.subr.bf16.mxu0 0
    %1222 = vmatpush1.bf16.msra.mxu0 0
    %1223 = vmatprep.subr.bf16.mxu0 0
    %1224 = vmatpush1.bf16.msra.mxu0 0
    %1225 = vmatprep.subr.bf16.mxu0 0
    %1226 = vmatpush1.bf16.msra.mxu0 0
    %1227 = vmatprep.subr.bf16.mxu0 0
    %1228 = vmatpush1.bf16.msra.mxu0 0
    %1229 = vmatprep.subr.bf16.mxu0 0
    %1230 = vmatpush1.bf16.msra.mxu0 0
    %1231 = vmatprep.subr.bf16.mxu0 0
    %1232 = vmatpush1.bf16.msra.mxu0 0
    %1233 = vmatprep.mubr.bf16.mxu0 0
    %1234 = vmatmul.mubr.bf16.gmra.mrb[0].mxu0 %v1129
    %v1235 = vpop.f32.mrb[0].mxu0
    %v1236 = vadd.f32 %v1151, %v1235
    %v1237 = vpop.f32.mrb[0].mxu0
    %v1238 = vpop.f32.mrb[0].mxu0
    %v1239 = vpop.f32.mrb[0].mxu0
    %1240 = vdwg.mxu0
    %v1241 = vmax.f32 %v1236, 0.0
    %v1242 = vunpack.c.l.bf16 %v1016
    %v1243 = vadd.f32 %v1241, %v1242
    %v1244 = vpack.c.bf16 %v1243, %v1243
    %v1245 = vld [vmem:[#allocation7] sm:$0xff]
    %v1246 = vld [vmem:[#allocation7 + $0x8] sm:$0xff]
    %v1247 = vld [vmem:[#allocation7 + $0x10] sm:$0xff]
    %v1248 = vld [vmem:[#allocation7 + $0x18] sm:$0xff]
    %v1249 = vld [vmem:[#allocation7 + $0x20] sm:$0xff]
    %v1250 = vld [vmem:[#allocation7 + $0x28] sm:$0xff]
    %v1251 = vld [vmem:[#allocation7 + $0x30] sm:$0xff]
    %v1252 = vld [vmem:[#allocation7 + $0x38] sm:$0xff]
    %v1253 = vld [vmem:[#allocation7 + $0x40] sm:$0xff]
    %v1254 = vld [vmem:[#allocation7 + $0x48] sm:$0xff]
    %v1255 = vld [vmem:[#allocation7 + $0x50] sm:$0xff]
    %v1256 = vld [vmem:[#allocation7 + $0x58] sm:$0xff]
    %v1257 = vld [vmem:[#allocation7 + $0x60] sm:$0xff]
    %v1258 = vld [vmem:[#allocation7 + $0x68] sm:$0xff]
    %v1259 = vld [vmem:[#allocation7 + $0x70] sm:$0xff]
    %v1260 = vld [vmem:[#allocation7 + $0x78] sm:$0xff]
    %v1261 = vld [vmem:[%s10] sm:$0x3]
    %v1263 = vlaneseq
    %v1264 = vshrl.u32 %v1263, 7
    %v1265 = vsub.s32 0, %v1264
    %v1266 = vrot.slane %v1261, %v1265
    %v1267 = vlaneseq
    %v1268 = vshrl.u32 %v1267, 7
    %v1269 = vsub.s32 1, %v1268
    %v1270 = vrot.slane %v1261, %v1269
    %v1289 = vunpack.c.l.b16 %v1245
    %v1290 = vunpack.c.h.b16 %v1245
    %v1291 = vunpack.c.l.b16 %v1246
    %v1292 = vunpack.c.h.b16 %v1246
    %v1293 = vunpack.c.l.b16 %v1247
    %v1294 = vunpack.c.h.b16 %v1247
    %v1295 = vunpack.c.l.b16 %v1248
    %v1296 = vunpack.c.h.b16 %v1248
    %v1297 = vunpack.c.l.b16 %v1249
    %v1298 = vunpack.c.h.b16 %v1249
    %v1299 = vunpack.c.l.b16 %v1250
    %v1300 = vunpack.c.h.b16 %v1250
    %v1301 = vunpack.c.l.b16 %v1251
    %v1302 = vunpack.c.h.b16 %v1251
    %v1303 = vunpack.c.l.b16 %v1252
    %v1304 = vunpack.c.h.b16 %v1252
    %v1305 = vunpack.c.l.b16 %v1253
    %v1306 = vunpack.c.h.b16 %v1253
    %v1307 = vunpack.c.l.b16 %v1254
    %v1308 = vunpack.c.h.b16 %v1254
    %v1309 = vunpack.c.l.b16 %v1255
    %v1310 = vunpack.c.h.b16 %v1255
    %v1311 = vunpack.c.l.b16 %v1256
    %v1312 = vunpack.c.h.b16 %v1256
    %v1313 = vunpack.c.l.b16 %v1257
    %v1314 = vunpack.c.h.b16 %v1257
    %v1315 = vunpack.c.l.b16 %v1258
    %v1316 = vunpack.c.h.b16 %v1258
    %v1317 = vunpack.c.l.b16 %v1259
    %v1318 = vunpack.c.h.b16 %v1259
    %v1319 = vunpack.c.l.b16 %v1260
    %v1320 = vunpack.c.h.b16 %v1260
    %v1321 = vpack.c.b16 %v1291, %v1289
    %v1322 = vpack.c.b16 %v1292, %v1290
    %v1323 = vpack.c.b16 %v1295, %v1293
    %v1324 = vpack.c.b16 %v1296, %v1294
    %v1325 = vpack.c.b16 %v1299, %v1297
    %v1326 = vpack.c.b16 %v1300, %v1298
    %v1327 = vpack.c.b16 %v1303, %v1301
    %v1328 = vpack.c.b16 %v1304, %v1302
    %v1329 = vpack.c.b16 %v1307, %v1305
    %v1330 = vpack.c.b16 %v1308, %v1306
    %v1331 = vpack.c.b16 %v1311, %v1309
    %v1332 = vpack.c.b16 %v1312, %v1310
    %v1333 = vpack.c.b16 %v1315, %v1313
    %v1334 = vpack.c.b16 %v1316, %v1314
    %v1335 = vpack.c.b16 %v1319, %v1317
    %v1336 = vpack.c.b16 %v1320, %v1318
    %1353 = vmatprep.subr.bf16.mxu0 %v1322
    %1354 = vmatpush1.bf16.msra.mxu0 %v1321
    %1355 = vmatprep.subr.bf16.mxu0 %v1324
    %1356 = vmatpush1.bf16.msra.mxu0 %v1323
    %1357 = vmatprep.subr.bf16.mxu0 %v1326
    %1358 = vmatpush1.bf16.msra.mxu0 %v1325
    %1359 = vmatprep.subr.bf16.mxu0 %v1328
    %1360 = vmatpush1.bf16.msra.mxu0 %v1327
    %1361 = vmatprep.subr.bf16.mxu0 %v1330
    %1362 = vmatpush1.bf16.msra.mxu0 %v1329
    %1363 = vmatprep.subr.bf16.mxu0 %v1332
    %1364 = vmatpush1.bf16.msra.mxu0 %v1331
    %1365 = vmatprep.subr.bf16.mxu0 %v1334
    %1366 = vmatpush1.bf16.msra.mxu0 %v1333
    %1367 = vmatprep.subr.bf16.mxu0 %v1336
    %1368 = vmatpush1.bf16.msra.mxu0 %v1335
    %1369 = vmatprep.subr.bf16.mxu0 0
    %1370 = vmatpush1.bf16.msra.mxu0 0
    %1371 = vmatprep.subr.bf16.mxu0 0
    %1372 = vmatpush1.bf16.msra.mxu0 0
    %1373 = vmatprep.subr.bf16.mxu0 0
    %1374 = vmatpush1.bf16.msra.mxu0 0
    %1375 = vmatprep.subr.bf16.mxu0 0
    %1376 = vmatpush1.bf16.msra.mxu0 0
    %1377 = vmatprep.subr.bf16.mxu0 0
    %1378 = vmatpush1.bf16.msra.mxu0 0
    %1379 = vmatprep.subr.bf16.mxu0 0
    %1380 = vmatpush1.bf16.msra.mxu0 0
    %1381 = vmatprep.subr.bf16.mxu0 0
    %1382 = vmatpush1.bf16.msra.mxu0 0
    %1383 = vmatprep.subr.bf16.mxu0 0
    %1384 = vmatpush1.bf16.msra.mxu0 0
    %1385 = vmatprep.mubr.bf16.mxu0 0
    %1386 = vmatmul.mubr.bf16.gmra.mrb[0].mxu0 %v1244
    %v1387 = vpop.f32.mrb[0].mxu0
    %v1388 = vadd.f32 %v1266, %v1387
    %v1389 = vpop.f32.mrb[0].mxu0
    %v1390 = vadd.f32 %v1270, %v1389
    %v1391 = vpop.f32.mrb[0].mxu0
    %v1392 = vpop.f32.mrb[0].mxu0
    %1393 = vdwg.mxu0
    %v1394 = vmax.f32 %v1388, 0.0
    %v1395 = vmax.f32 %v1390, 0.0
    %v1396 = vunpack.c.l.bf16 %v838
    %v1397 = vunpack.c.l.bf16 %v839
    %v1398 = vadd.f32 %v1394, %v1396
    %v1399 = vadd.f32 %v1395, %v1397
    %v1400 = vpack.c.bf16 %v1398, %v1398
    %v1401 = vpack.c.bf16 %v1399, %v1399
    %v1402 = vld [vmem:[#allocation9] sm:$0xff]
    %v1403 = vld [vmem:[#allocation9 + $0x8] sm:$0xff]
    %v1404 = vld [vmem:[#allocation9 + $0x10] sm:$0xff]
    %v1405 = vld [vmem:[#allocation9 + $0x18] sm:$0xff]
    %v1406 = vld [vmem:[#allocation9 + $0x20] sm:$0xff]
    %v1407 = vld [vmem:[#allocation9 + $0x28] sm:$0xff]
    %v1408 = vld [vmem:[#allocation9 + $0x30] sm:$0xff]
    %v1409 = vld [vmem:[#allocation9 + $0x38] sm:$0xff]
    %v1410 = vld [vmem:[#allocation9 + $0x40] sm:$0xff]
    %v1411 = vld [vmem:[#allocation9 + $0x48] sm:$0xff]
    %v1412 = vld [vmem:[#allocation9 + $0x50] sm:$0xff]
    %v1413 = vld [vmem:[#allocation9 + $0x58] sm:$0xff]
    %v1414 = vld [vmem:[#allocation9 + $0x60] sm:$0xff]
    %v1415 = vld [vmem:[#allocation9 + $0x68] sm:$0xff]
    %v1416 = vld [vmem:[#allocation9 + $0x70] sm:$0xff]
    %v1417 = vld [vmem:[#allocation9 + $0x78] sm:$0xff]
    %v1418 = vld [vmem:[#allocation9 + $0x80] sm:$0xff]
    %v1419 = vld [vmem:[#allocation9 + $0x88] sm:$0xff]
    %v1420 = vld [vmem:[#allocation9 + $0x90] sm:$0xff]
    %v1421 = vld [vmem:[#allocation9 + $0x98] sm:$0xff]
    %v1422 = vld [vmem:[#allocation9 + $0xa0] sm:$0xff]
    %v1423 = vld [vmem:[#allocation9 + $0xa8] sm:$0xff]
    %v1424 = vld [vmem:[#allocation9 + $0xb0] sm:$0xff]
    %v1425 = vld [vmem:[#allocation9 + $0xb8] sm:$0xff]
    %v1426 = vld [vmem:[#allocation9 + $0xc0] sm:$0xff]
    %v1427 = vld [vmem:[#allocation9 + $0xc8] sm:$0xff]
    %v1428 = vld [vmem:[#allocation9 + $0xd0] sm:$0xff]
    %v1429 = vld [vmem:[#allocation9 + $0xd8] sm:$0xff]
    %v1430 = vld [vmem:[#allocation9 + $0xe0] sm:$0xff]
    %v1431 = vld [vmem:[#allocation9 + $0xe8] sm:$0xff]
    %v1432 = vld [vmem:[#allocation9 + $0xf0] sm:$0xff]
    %v1433 = vld [vmem:[#allocation9 + $0xf8] sm:$0xff]
    %v1434 = vld [vmem:[#allocation9 + $0x100] sm:$0xff]
    %v1435 = vld [vmem:[#allocation9 + $0x108] sm:$0xff]
    %v1436 = vld [vmem:[#allocation9 + $0x110] sm:$0xff]
    %v1437 = vld [vmem:[#allocation9 + $0x118] sm:$0xff]
    %v1438 = vld [vmem:[#allocation9 + $0x120] sm:$0xff]
    %v1439 = vld [vmem:[#allocation9 + $0x128] sm:$0xff]
    %v1440 = vld [vmem:[#allocation9 + $0x130] sm:$0xff]
    %v1441 = vld [vmem:[#allocation9 + $0x138] sm:$0xff]
    %v1442 = vld [vmem:[#allocation9 + $0x140] sm:$0xff]
    %v1443 = vld [vmem:[#allocation9 + $0x148] sm:$0xff]
    %v1444 = vld [vmem:[#allocation9 + $0x150] sm:$0xff]
    %v1445 = vld [vmem:[#allocation9 + $0x158] sm:$0xff]
    %v1446 = vld [vmem:[#allocation9 + $0x160] sm:$0xff]
    %v1447 = vld [vmem:[#allocation9 + $0x168] sm:$0xff]
    %v1448 = vld [vmem:[#allocation9 + $0x170] sm:$0xff]
    %v1449 = vld [vmem:[#allocation9 + $0x178] sm:$0xff]
    %v1450 = vld [vmem:[#allocation9 + $0x180] sm:$0xff]
    %v1451 = vld [vmem:[#allocation9 + $0x188] sm:$0xff]
    %v1452 = vld [vmem:[#allocation9 + $0x190] sm:$0xff]
    %v1453 = vld [vmem:[#allocation9 + $0x198] sm:$0xff]
    %v1454 = vld [vmem:[#allocation9 + $0x1a0] sm:$0xff]
    %v1455 = vld [vmem:[#allocation9 + $0x1a8] sm:$0xff]
    %v1456 = vld [vmem:[#allocation9 + $0x1b0] sm:$0xff]
    %v1457 = vld [vmem:[#allocation9 + $0x1b8] sm:$0xff]
    %v1458 = vld [vmem:[#allocation9 + $0x1c0] sm:$0xff]
    %v1459 = vld [vmem:[#allocation9 + $0x1c8] sm:$0xff]
    %v1460 = vld [vmem:[#allocation9 + $0x1d0] sm:$0xff]
    %v1461 = vld [vmem:[#allocation9 + $0x1d8] sm:$0xff]
    %v1462 = vld [vmem:[#allocation9 + $0x1e0] sm:$0xff]
    %v1463 = vld [vmem:[#allocation9 + $0x1e8] sm:$0xff]
    %v1464 = vld [vmem:[#allocation9 + $0x1f0] sm:$0xff]
    %v1465 = vld [vmem:[#allocation9 + $0x1f8] sm:$0xff]
    %v1466 = vld [vmem:[#allocation9 + $0x200] sm:$0xff]
    %v1467 = vld [vmem:[#allocation9 + $0x208] sm:$0xff]
    %v1468 = vld [vmem:[#allocation9 + $0x210] sm:$0xff]
    %v1469 = vld [vmem:[#allocation9 + $0x218] sm:$0xff]
    %v1470 = vld [vmem:[#allocation9 + $0x220] sm:$0xff]
    %v1471 = vld [vmem:[#allocation9 + $0x228] sm:$0xff]
    %v1472 = vld [vmem:[#allocation9 + $0x230] sm:$0xff]
    %v1473 = vld [vmem:[#allocation9 + $0x238] sm:$0xff]
    %v1474 = vld [vmem:[#allocation9 + $0x240] sm:$0xff]
    %v1475 = vld [vmem:[#allocation9 + $0x248] sm:$0xff]
    %v1476 = vld [vmem:[#allocation9 + $0x250] sm:$0xff]
    %v1477 = vld [vmem:[#allocation9 + $0x258] sm:$0xff]
    %v1478 = vld [vmem:[#allocation9 + $0x260] sm:$0xff]
    %v1479 = vld [vmem:[#allocation9 + $0x268] sm:$0xff]
    %v1480 = vld [vmem:[#allocation9 + $0x270] sm:$0xff]
    %v1481 = vld [vmem:[#allocation9 + $0x278] sm:$0xff]
    %v1482 = vld [vmem:[#allocation9 + $0x280] sm:$0xff]
    %v1483 = vld [vmem:[#allocation9 + $0x288] sm:$0xff]
    %v1484 = vld [vmem:[#allocation9 + $0x290] sm:$0xff]
    %v1485 = vld [vmem:[#allocation9 + $0x298] sm:$0xff]
    %v1486 = vld [vmem:[#allocation9 + $0x2a0] sm:$0xff]
    %v1487 = vld [vmem:[#allocation9 + $0x2a8] sm:$0xff]
    %v1488 = vld [vmem:[#allocation9 + $0x2b0] sm:$0xff]
    %v1489 = vld [vmem:[#allocation9 + $0x2b8] sm:$0xff]
    %v1490 = vld [vmem:[#allocation9 + $0x2c0] sm:$0xff]
    %v1491 = vld [vmem:[#allocation9 + $0x2c8] sm:$0xff]
    %v1492 = vld [vmem:[#allocation9 + $0x2d0] sm:$0xff]
    %v1493 = vld [vmem:[#allocation9 + $0x2d8] sm:$0xff]
    %v1494 = vld [vmem:[#allocation9 + $0x2e0] sm:$0xff]
    %v1495 = vld [vmem:[#allocation9 + $0x2e8] sm:$0xff]
    %v1496 = vld [vmem:[#allocation9 + $0x2f0] sm:$0xff]
    %v1497 = vld [vmem:[#allocation9 + $0x2f8] sm:$0xff]
    %v1498 = vld [vmem:[%s12] sm:$0x3f]
    %v1500 = vlaneseq
    %v1501 = vshrl.u32 %v1500, 7
    %v1502 = vsub.s32 0, %v1501
    %v1503 = vrot.slane %v1498, %v1502
    %v1504 = vlaneseq
    %v1505 = vshrl.u32 %v1504, 7
    %v1506 = vsub.s32 1, %v1505
    %v1507 = vrot.slane %v1498, %v1506
    %v1508 = vlaneseq
    %v1509 = vshrl.u32 %v1508, 7
    %v1510 = vsub.s32 2, %v1509
    %v1511 = vrot.slane %v1498, %v1510
    %v1512 = vlaneseq
    %v1513 = vshrl.u32 %v1512, 7
    %v1514 = vsub.s32 3, %v1513
    %v1515 = vrot.slane %v1498, %v1514
    %v1516 = vlaneseq
    %v1517 = vshrl.u32 %v1516, 7
    %v1518 = vsub.s32 4, %v1517
    %v1519 = vrot.slane %v1498, %v1518
    %v1520 = vlaneseq
    %v1521 = vshrl.u32 %v1520, 7
    %v1522 = vsub.s32 5, %v1521
    %v1523 = vrot.slane %v1498, %v1522
    %v1626 = vunpack.c.l.b16 %v1402
    %v1627 = vunpack.c.h.b16 %v1402
    %v1628 = vunpack.c.l.b16 %v1403
    %v1629 = vunpack.c.h.b16 %v1403
    %v1630 = vunpack.c.l.b16 %v1404
    %v1631 = vunpack.c.h.b16 %v1404
    %v1632 = vunpack.c.l.b16 %v1405
    %v1633 = vunpack.c.h.b16 %v1405
    %v1634 = vunpack.c.l.b16 %v1406
    %v1635 = vunpack.c.h.b16 %v1406
    %v1636 = vunpack.c.l.b16 %v1407
    %v1637 = vunpack.c.h.b16 %v1407
    %v1638 = vunpack.c.l.b16 %v1408
    %v1639 = vunpack.c.h.b16 %v1408
    %v1640 = vunpack.c.l.b16 %v1409
    %v1641 = vunpack.c.h.b16 %v1409
    %v1642 = vunpack.c.l.b16 %v1410
    %v1643 = vunpack.c.h.b16 %v1410
    %v1644 = vunpack.c.l.b16 %v1411
    %v1645 = vunpack.c.h.b16 %v1411
    %v1646 = vunpack.c.l.b16 %v1412
    %v1647 = vunpack.c.h.b16 %v1412
    %v1648 = vunpack.c.l.b16 %v1413
    %v1649 = vunpack.c.h.b16 %v1413
    %v1650 = vunpack.c.l.b16 %v1414
    %v1651 = vunpack.c.h.b16 %v1414
    %v1652 = vunpack.c.l.b16 %v1415
    %v1653 = vunpack.c.h.b16 %v1415
    %v1654 = vunpack.c.l.b16 %v1416
    %v1655 = vunpack.c.h.b16 %v1416
    %v1656 = vunpack.c.l.b16 %v1417
    %v1657 = vunpack.c.h.b16 %v1417
    %v1658 = vunpack.c.l.b16 %v1418
    %v1659 = vunpack.c.h.b16 %v1418
    %v1660 = vunpack.c.l.b16 %v1419
    %v1661 = vunpack.c.h.b16 %v1419
    %v1662 = vunpack.c.l.b16 %v1420
    %v1663 = vunpack.c.h.b16 %v1420
    %v1664 = vunpack.c.l.b16 %v1421
    %v1665 = vunpack.c.h.b16 %v1421
    %v1666 = vunpack.c.l.b16 %v1422
    %v1667 = vunpack.c.h.b16 %v1422
    %v1668 = vunpack.c.l.b16 %v1423
    %v1669 = vunpack.c.h.b16 %v1423
    %v1670 = vunpack.c.l.b16 %v1424
    %v1671 = vunpack.c.h.b16 %v1424
    %v1672 = vunpack.c.l.b16 %v1425
    %v1673 = vunpack.c.h.b16 %v1425
    %v1674 = vunpack.c.l.b16 %v1426
    %v1675 = vunpack.c.h.b16 %v1426
    %v1676 = vunpack.c.l.b16 %v1427
    %v1677 = vunpack.c.h.b16 %v1427
    %v1678 = vunpack.c.l.b16 %v1428
    %v1679 = vunpack.c.h.b16 %v1428
    %v1680 = vunpack.c.l.b16 %v1429
    %v1681 = vunpack.c.h.b16 %v1429
    %v1682 = vunpack.c.l.b16 %v1430
    %v1683 = vunpack.c.h.b16 %v1430
    %v1684 = vunpack.c.l.b16 %v1431
    %v1685 = vunpack.c.h.b16 %v1431
    %v1686 = vunpack.c.l.b16 %v1432
    %v1687 = vunpack.c.h.b16 %v1432
    %v1688 = vunpack.c.l.b16 %v1433
    %v1689 = vunpack.c.h.b16 %v1433
    %v1690 = vunpack.c.l.b16 %v1434
    %v1691 = vunpack.c.h.b16 %v1434
    %v1692 = vunpack.c.l.b16 %v1435
    %v1693 = vunpack.c.h.b16 %v1435
    %v1694 = vunpack.c.l.b16 %v1436
    %v1695 = vunpack.c.h.b16 %v1436
    %v1696 = vunpack.c.l.b16 %v1437
    %v1697 = vunpack.c.h.b16 %v1437
    %v1698 = vunpack.c.l.b16 %v1438
    %v1699 = vunpack.c.h.b16 %v1438
    %v1700 = vunpack.c.l.b16 %v1439
    %v1701 = vunpack.c.h.b16 %v1439
    %v1702 = vunpack.c.l.b16 %v1440
    %v1703 = vunpack.c.h.b16 %v1440
    %v1704 = vunpack.c.l.b16 %v1441
    %v1705 = vunpack.c.h.b16 %v1441
    %v1706 = vunpack.c.l.b16 %v1442
    %v1707 = vunpack.c.h.b16 %v1442
    %v1708 = vunpack.c.l.b16 %v1443
    %v1709 = vunpack.c.h.b16 %v1443
    %v1710 = vunpack.c.l.b16 %v1444
    %v1711 = vunpack.c.h.b16 %v1444
    %v1712 = vunpack.c.l.b16 %v1445
    %v1713 = vunpack.c.h.b16 %v1445
    %v1714 = vunpack.c.l.b16 %v1446
    %v1715 = vunpack.c.h.b16 %v1446
    %v1716 = vunpack.c.l.b16 %v1447
    %v1717 = vunpack.c.h.b16 %v1447
    %v1718 = vunpack.c.l.b16 %v1448
    %v1719 = vunpack.c.h.b16 %v1448
    %v1720 = vunpack.c.l.b16 %v1449
    %v1721 = vunpack.c.h.b16 %v1449
    %v1722 = vunpack.c.l.b16 %v1450
    %v1723 = vunpack.c.h.b16 %v1450
    %v1724 = vunpack.c.l.b16 %v1451
    %v1725 = vunpack.c.h.b16 %v1451
    %v1726 = vunpack.c.l.b16 %v1452
    %v1727 = vunpack.c.h.b16 %v1452
    %v1728 = vunpack.c.l.b16 %v1453
    %v1729 = vunpack.c.h.b16 %v1453
    %v1730 = vunpack.c.l.b16 %v1454
    %v1731 = vunpack.c.h.b16 %v1454
    %v1732 = vunpack.c.l.b16 %v1455
    %v1733 = vunpack.c.h.b16 %v1455
    %v1734 = vunpack.c.l.b16 %v1456
    %v1735 = vunpack.c.h.b16 %v1456
    %v1736 = vunpack.c.l.b16 %v1457
    %v1737 = vunpack.c.h.b16 %v1457
    %v1738 = vunpack.c.l.b16 %v1458
    %v1739 = vunpack.c.h.b16 %v1458
    %v1740 = vunpack.c.l.b16 %v1459
    %v1741 = vunpack.c.h.b16 %v1459
    %v1742 = vunpack.c.l.b16 %v1460
    %v1743 = vunpack.c.h.b16 %v1460
    %v1744 = vunpack.c.l.b16 %v1461
    %v1745 = vunpack.c.h.b16 %v1461
    %v1746 = vunpack.c.l.b16 %v1462
    %v1747 = vunpack.c.h.b16 %v1462
    %v1748 = vunpack.c.l.b16 %v1463
    %v1749 = vunpack.c.h.b16 %v1463
    %v1750 = vunpack.c.l.b16 %v1464
    %v1751 = vunpack.c.h.b16 %v1464
    %v1752 = vunpack.c.l.b16 %v1465
    %v1753 = vunpack.c.h.b16 %v1465
    %v1754 = vunpack.c.l.b16 %v1466
    %v1755 = vunpack.c.h.b16 %v1466
    %v1756 = vunpack.c.l.b16 %v1467
    %v1757 = vunpack.c.h.b16 %v1467
    %v1758 = vunpack.c.l.b16 %v1468
    %v1759 = vunpack.c.h.b16 %v1468
    %v1760 = vunpack.c.l.b16 %v1469
    %v1761 = vunpack.c.h.b16 %v1469
    %v1762 = vunpack.c.l.b16 %v1470
    %v1763 = vunpack.c.h.b16 %v1470
    %v1764 = vunpack.c.l.b16 %v1471
    %v1765 = vunpack.c.h.b16 %v1471
    %v1766 = vunpack.c.l.b16 %v1472
    %v1767 = vunpack.c.h.b16 %v1472
    %v1768 = vunpack.c.l.b16 %v1473
    %v1769 = vunpack.c.h.b16 %v1473
    %v1770 = vunpack.c.l.b16 %v1474
    %v1771 = vunpack.c.h.b16 %v1474
    %v1772 = vunpack.c.l.b16 %v1475
    %v1773 = vunpack.c.h.b16 %v1475
    %v1774 = vunpack.c.l.b16 %v1476
    %v1775 = vunpack.c.h.b16 %v1476
    %v1776 = vunpack.c.l.b16 %v1477
    %v1777 = vunpack.c.h.b16 %v1477
    %v1778 = vunpack.c.l.b16 %v1478
    %v1779 = vunpack.c.h.b16 %v1478
    %v1780 = vunpack.c.l.b16 %v1479
    %v1781 = vunpack.c.h.b16 %v1479
    %v1782 = vunpack.c.l.b16 %v1480
    %v1783 = vunpack.c.h.b16 %v1480
    %v1784 = vunpack.c.l.b16 %v1481
    %v1785 = vunpack.c.h.b16 %v1481
    %v1786 = vunpack.c.l.b16 %v1482
    %v1787 = vunpack.c.h.b16 %v1482
    %v1788 = vunpack.c.l.b16 %v1483
    %v1789 = vunpack.c.h.b16 %v1483
    %v1790 = vunpack.c.l.b16 %v1484
    %v1791 = vunpack.c.h.b16 %v1484
    %v1792 = vunpack.c.l.b16 %v1485
    %v1793 = vunpack.c.h.b16 %v1485
    %v1794 = vunpack.c.l.b16 %v1486
    %v1795 = vunpack.c.h.b16 %v1486
    %v1796 = vunpack.c.l.b16 %v1487
    %v1797 = vunpack.c.h.b16 %v1487
    %v1798 = vunpack.c.l.b16 %v1488
    %v1799 = vunpack.c.h.b16 %v1488
    %v1800 = vunpack.c.l.b16 %v1489
    %v1801 = vunpack.c.h.b16 %v1489
    %v1802 = vunpack.c.l.b16 %v1490
    %v1803 = vunpack.c.h.b16 %v1490
    %v1804 = vunpack.c.l.b16 %v1491
    %v1805 = vunpack.c.h.b16 %v1491
    %v1806 = vunpack.c.l.b16 %v1492
    %v1807 = vunpack.c.h.b16 %v1492
    %v1808 = vunpack.c.l.b16 %v1493
    %v1809 = vunpack.c.h.b16 %v1493
    %v1810 = vunpack.c.l.b16 %v1494
    %v1811 = vunpack.c.h.b16 %v1494
    %v1812 = vunpack.c.l.b16 %v1495
    %v1813 = vunpack.c.h.b16 %v1495
    %v1814 = vunpack.c.l.b16 %v1496
    %v1815 = vunpack.c.h.b16 %v1496
    %v1816 = vunpack.c.l.b16 %v1497
    %v1817 = vunpack.c.h.b16 %v1497
    %v1818 = vpack.c.b16 %v1632, %v1626
    %v1819 = vpack.c.b16 %v1633, %v1627
    %v1820 = vpack.c.b16 %v1634, %v1628
    %v1821 = vpack.c.b16 %v1635, %v1629
    %v1822 = vpack.c.b16 %v1636, %v1630
    %v1823 = vpack.c.b16 %v1637, %v1631
    %v1824 = vpack.c.b16 %v1644, %v1638
    %v1825 = vpack.c.b16 %v1645, %v1639
    %v1826 = vpack.c.b16 %v1646, %v1640
    %v1827 = vpack.c.b16 %v1647, %v1641
    %v1828 = vpack.c.b16 %v1648, %v1642
    %v1829 = vpack.c.b16 %v1649, %v1643
    %v1830 = vpack.c.b16 %v1656, %v1650
    %v1831 = vpack.c.b16 %v1657, %v1651
    %v1832 = vpack.c.b16 %v1658, %v1652
    %v1833 = vpack.c.b16 %v1659, %v1653
    %v1834 = vpack.c.b16 %v1660, %v1654
    %v1835 = vpack.c.b16 %v1661, %v1655
    %v1836 = vpack.c.b16 %v1668, %v1662
    %v1837 = vpack.c.b16 %v1669, %v1663
    %v1838 = vpack.c.b16 %v1670, %v1664
    %v1839 = vpack.c.b16 %v1671, %v1665
    %v1840 = vpack.c.b16 %v1672, %v1666
    %v1841 = vpack.c.b16 %v1673, %v1667
    %v1842 = vpack.c.b16 %v1680, %v1674
    %v1843 = vpack.c.b16 %v1681, %v1675
    %v1844 = vpack.c.b16 %v1682, %v1676
    %v1845 = vpack.c.b16 %v1683, %v1677
    %v1846 = vpack.c.b16 %v1684, %v1678
    %v1847 = vpack.c.b16 %v1685, %v1679
    %v1848 = vpack.c.b16 %v1692, %v1686
    %v1849 = vpack.c.b16 %v1693, %v1687
    %v1850 = vpack.c.b16 %v1694, %v1688
    %v1851 = vpack.c.b16 %v1695, %v1689
    %v1852 = vpack.c.b16 %v1696, %v1690
    %v1853 = vpack.c.b16 %v1697, %v1691
    %v1854 = vpack.c.b16 %v1704, %v1698
    %v1855 = vpack.c.b16 %v1705, %v1699
    %v1856 = vpack.c.b16 %v1706, %v1700
    %v1857 = vpack.c.b16 %v1707, %v1701
    %v1858 = vpack.c.b16 %v1708, %v1702
    %v1859 = vpack.c.b16 %v1709, %v1703
    %v1860 = vpack.c.b16 %v1716, %v1710
    %v1861 = vpack.c.b16 %v1717, %v1711
    %v1862 = vpack.c.b16 %v1718, %v1712
    %v1863 = vpack.c.b16 %v1719, %v1713
    %v1864 = vpack.c.b16 %v1720, %v1714
    %v1865 = vpack.c.b16 %v1721, %v1715
    %v1866 = vpack.c.b16 %v1728, %v1722
    %v1867 = vpack.c.b16 %v1729, %v1723
    %v1868 = vpack.c.b16 %v1730, %v1724
    %v1869 = vpack.c.b16 %v1731, %v1725
    %v1870 = vpack.c.b16 %v1732, %v1726
    %v1871 = vpack.c.b16 %v1733, %v1727
    %v1872 = vpack.c.b16 %v1740, %v1734
    %v1873 = vpack.c.b16 %v1741, %v1735
    %v1874 = vpack.c.b16 %v1742, %v1736
    %v1875 = vpack.c.b16 %v1743, %v1737
    %v1876 = vpack.c.b16 %v1744, %v1738
    %v1877 = vpack.c.b16 %v1745, %v1739
    %v1878 = vpack.c.b16 %v1752, %v1746
    %v1879 = vpack.c.b16 %v1753, %v1747
    %v1880 = vpack.c.b16 %v1754, %v1748
    %v1881 = vpack.c.b16 %v1755, %v1749
    %v1882 = vpack.c.b16 %v1756, %v1750
    %v1883 = vpack.c.b16 %v1757, %v1751
    %v1884 = vpack.c.b16 %v1764, %v1758
    %v1885 = vpack.c.b16 %v1765, %v1759
    %v1886 = vpack.c.b16 %v1766, %v1760
    %v1887 = vpack.c.b16 %v1767, %v1761
    %v1888 = vpack.c.b16 %v1768, %v1762
    %v1889 = vpack.c.b16 %v1769, %v1763
    %v1890 = vpack.c.b16 %v1776, %v1770
    %v1891 = vpack.c.b16 %v1777, %v1771
    %v1892 = vpack.c.b16 %v1778, %v1772
    %v1893 = vpack.c.b16 %v1779, %v1773
    %v1894 = vpack.c.b16 %v1780, %v1774
    %v1895 = vpack.c.b16 %v1781, %v1775
    %v1896 = vpack.c.b16 %v1788, %v1782
    %v1897 = vpack.c.b16 %v1789, %v1783
    %v1898 = vpack.c.b16 %v1790, %v1784
    %v1899 = vpack.c.b16 %v1791, %v1785
    %v1900 = vpack.c.b16 %v1792, %v1786
    %v1901 = vpack.c.b16 %v1793, %v1787
    %v1902 = vpack.c.b16 %v1800, %v1794
    %v1903 = vpack.c.b16 %v1801, %v1795
    %v1904 = vpack.c.b16 %v1802, %v1796
    %v1905 = vpack.c.b16 %v1803, %v1797
    %v1906 = vpack.c.b16 %v1804, %v1798
    %v1907 = vpack.c.b16 %v1805, %v1799
    %v1908 = vpack.c.b16 %v1812, %v1806
    %v1909 = vpack.c.b16 %v1813, %v1807
    %v1910 = vpack.c.b16 %v1814, %v1808
    %v1911 = vpack.c.b16 %v1815, %v1809
    %v1912 = vpack.c.b16 %v1816, %v1810
    %v1913 = vpack.c.b16 %v1817, %v1811
    %2010 = vmatprep.subr.bf16.mxu0 %v1819
    %2011 = vmatpush1.bf16.msra.mxu0 %v1818
    %2012 = vmatprep.subr.bf16.mxu0 %v1825
    %2013 = vmatpush1.bf16.msra.mxu0 %v1824
    %2014 = vmatprep.subr.bf16.mxu0 %v1831
    %2015 = vmatpush1.bf16.msra.mxu0 %v1830
    %2016 = vmatprep.subr.bf16.mxu0 %v1837
    %2017 = vmatpush1.bf16.msra.mxu0 %v1836
    %2018 = vmatprep.subr.bf16.mxu0 %v1843
    %2019 = vmatpush1.bf16.msra.mxu0 %v1842
    %2020 = vmatprep.subr.bf16.mxu0 %v1849
    %2021 = vmatpush1.bf16.msra.mxu0 %v1848
    %2022 = vmatprep.subr.bf16.mxu0 %v1855
    %2023 = vmatpush1.bf16.msra.mxu0 %v1854
    %2024 = vmatprep.subr.bf16.mxu0 %v1861
    %2025 = vmatpush1.bf16.msra.mxu0 %v1860
    %2026 = vmatprep.subr.bf16.mxu0 %v1867
    %2027 = vmatpush1.bf16.msra.mxu0 %v1866
    %2028 = vmatprep.subr.bf16.mxu0 %v1873
    %2029 = vmatpush1.bf16.msra.mxu0 %v1872
    %2030 = vmatprep.subr.bf16.mxu0 %v1879
    %2031 = vmatpush1.bf16.msra.mxu0 %v1878
    %2032 = vmatprep.subr.bf16.mxu0 %v1885
    %2033 = vmatpush1.bf16.msra.mxu0 %v1884
    %2034 = vmatprep.subr.bf16.mxu0 %v1891
    %2035 = vmatpush1.bf16.msra.mxu0 %v1890
    %2036 = vmatprep.subr.bf16.mxu0 %v1897
    %2037 = vmatpush1.bf16.msra.mxu0 %v1896
    %2038 = vmatprep.subr.bf16.mxu0 %v1903
    %2039 = vmatpush1.bf16.msra.mxu0 %v1902
    %2040 = vmatprep.subr.bf16.mxu0 %v1909
    %2041 = vmatpush1.bf16.msra.mxu0 %v1908
    %2042 = vmatprep.mubr.bf16.mxu0 %v1401
    %2043 = vmatmul.mubr.bf16.gmra.mrb[0].mxu0 %v1400
    %v2044 = vpop.f32.mrb[0].mxu0
    %v2045 = vadd.f32 %v1503, %v2044
    %v2046 = vpop.f32.mrb[0].mxu0
    %v2047 = vadd.f32 %v1507, %v2046
    %v2048 = vpop.f32.mrb[0].mxu0
    %v2049 = vpop.f32.mrb[0].mxu0
    %2050 = vdwg.mxu0
    %2051 = vmatprep.subr.bf16.mxu0 %v1821
    %2052 = vmatpush1.bf16.msra.mxu0 %v1820
    %2053 = vmatprep.subr.bf16.mxu0 %v1827
    %2054 = vmatpush1.bf16.msra.mxu0 %v1826
    %2055 = vmatprep.subr.bf16.mxu0 %v1833
    %2056 = vmatpush1.bf16.msra.mxu0 %v1832
    %2057 = vmatprep.subr.bf16.mxu0 %v1839
    %2058 = vmatpush1.bf16.msra.mxu0 %v1838
    %2059 = vmatprep.subr.bf16.mxu0 %v1845
    %2060 = vmatpush1.bf16.msra.mxu0 %v1844
    %2061 = vmatprep.subr.bf16.mxu0 %v1851
    %2062 = vmatpush1.bf16.msra.mxu0 %v1850
    %2063 = vmatprep.subr.bf16.mxu0 %v1857
    %2064 = vmatpush1.bf16.msra.mxu0 %v1856
    %2065 = vmatprep.subr.bf16.mxu0 %v1863
    %2066 = vmatpush1.bf16.msra.mxu0 %v1862
    %2067 = vmatprep.subr.bf16.mxu0 %v1869
    %2068 = vmatpush1.bf16.msra.mxu0 %v1868
    %2069 = vmatprep.subr.bf16.mxu0 %v1875
    %2070 = vmatpush1.bf16.msra.mxu0 %v1874
    %2071 = vmatprep.subr.bf16.mxu0 %v1881
    %2072 = vmatpush1.bf16.msra.mxu0 %v1880
    %2073 = vmatprep.subr.bf16.mxu0 %v1887
    %2074 = vmatpush1.bf16.msra.mxu0 %v1886
    %2075 = vmatprep.subr.bf16.mxu0 %v1893
    %2076 = vmatpush1.bf16.msra.mxu0 %v1892
    %2077 = vmatprep.subr.bf16.mxu0 %v1899
    %2078 = vmatpush1.bf16.msra.mxu0 %v1898
    %2079 = vmatprep.subr.bf16.mxu0 %v1905
    %2080 = vmatpush1.bf16.msra.mxu0 %v1904
    %2081 = vmatprep.subr.bf16.mxu0 %v1911
    %2082 = vmatpush1.bf16.msra.mxu0 %v1910
    %2083 = vmatprep.mubr.bf16.mxu0 %v1401
    %2084 = vmatmul.mubr.bf16.gmra.mrb[0].mxu0 %v1400
    %v2085 = vpop.f32.mrb[0].mxu0
    %v2086 = vadd.f32 %v1511, %v2085
    %v2087 = vpop.f32.mrb[0].mxu0
    %v2088 = vadd.f32 %v1515, %v2087
    %v2089 = vpop.f32.mrb[0].mxu0
    %v2090 = vpop.f32.mrb[0].mxu0
    %2091 = vdwg.mxu0
    %2092 = vmatprep.subr.bf16.mxu0 %v1823
    %2093 = vmatpush1.bf16.msra.mxu0 %v1822
    %2094 = vmatprep.subr.bf16.mxu0 %v1829
    %2095 = vmatpush1.bf16.msra.mxu0 %v1828
    %2096 = vmatprep.subr.bf16.mxu0 %v1835
    %2097 = vmatpush1.bf16.msra.mxu0 %v1834
    %2098 = vmatprep.subr.bf16.mxu0 %v1841
    %2099 = vmatpush1.bf16.msra.mxu0 %v1840
    %2100 = vmatprep.subr.bf16.mxu0 %v1847
    %2101 = vmatpush1.bf16.msra.mxu0 %v1846
    %2102 = vmatprep.subr.bf16.mxu0 %v1853
    %2103 = vmatpush1.bf16.msra.mxu0 %v1852
    %2104 = vmatprep.subr.bf16.mxu0 %v1859
    %2105 = vmatpush1.bf16.msra.mxu0 %v1858
    %2106 = vmatprep.subr.bf16.mxu0 %v1865
    %2107 = vmatpush1.bf16.msra.mxu0 %v1864
    %2108 = vmatprep.subr.bf16.mxu0 %v1871
    %2109 = vmatpush1.bf16.msra.mxu0 %v1870
    %2110 = vmatprep.subr.bf16.mxu0 %v1877
    %2111 = vmatpush1.bf16.msra.mxu0 %v1876
    %2112 = vmatprep.subr.bf16.mxu0 %v1883
    %2113 = vmatpush1.bf16.msra.mxu0 %v1882
    %2114 = vmatprep.subr.bf16.mxu0 %v1889
    %2115 = vmatpush1.bf16.msra.mxu0 %v1888
    %2116 = vmatprep.subr.bf16.mxu0 %v1895
    %2117 = vmatpush1.bf16.msra.mxu0 %v1894
    %2118 = vmatprep.subr.bf16.mxu0 %v1901
    %2119 = vmatpush1.bf16.msra.mxu0 %v1900
    %2120 = vmatprep.subr.bf16.mxu0 %v1907
    %2121 = vmatpush1.bf16.msra.mxu0 %v1906
    %2122 = vmatprep.subr.bf16.mxu0 %v1913
    %2123 = vmatpush1.bf16.msra.mxu0 %v1912
    %2124 = vmatprep.mubr.bf16.mxu0 %v1401
    %2125 = vmatmul.mubr.bf16.gmra.mrb[0].mxu0 %v1400
    %v2126 = vpop.f32.mrb[0].mxu0
    %v2127 = vadd.f32 %v1519, %v2126
    %v2128 = vpop.f32.mrb[0].mxu0
    %v2129 = vadd.f32 %v1523, %v2128
    %v2130 = vpop.f32.mrb[0].mxu0
    %v2131 = vpop.f32.mrb[0].mxu0
    %2132 = vdwg.mxu0
    %2133 = vst [vmem:[%s13] sm:$0xff] %v2045
    %2134 = vst [vmem:[%s13 + $0x8] sm:$0xff] %v2047
    %2135 = vst [vmem:[%s13 + $0x10] sm:$0xff] %v2086
    %2136 = vst [vmem:[%s13 + $0x18] sm:$0xff] %v2088
    %2137 = vst [vmem:[%s13 + $0x20] sm:$0xff] %v2127
    %2138 = vst [vmem:[%s13 + $0x28] sm:$0xff] %v2129
    // Predicated region
    $region74: #{net_forward.1} parent=1 // pred_check
      _
    $region75: #{net_forward.1} parent=1 // pred_check_branch
      %2140 = sbr.rel (0) target = $region77
    $region76: #{net_forward.1} parent=1 // pred_region
      _
    $region77: #{net_forward.1} parent=1 // pred_fallthru
      _
    // Predicated region
    $region78: #{net_forward.1} parent=1 // pred_check
      _
    $region79: #{net_forward.1} parent=1 // pred_check_branch
      %2142 = sbr.rel (0) target = $region81
    $region80: #{net_forward.1} parent=1 // pred_region
      _
    $region81: #{net_forward.1} parent=1 // pred_fallthru
      _
    %2143 = vsyncpa [#allocation3], 1
    %2144 = vsyncpa [#allocation5], 1
    %2145 = vsyncpa [#allocation8], 1

</llo_original>
